<compile_context>
chip_gen: v6e
topology: v6e:2x2x1
jax: 0.10.0
libtpu: 0.0.40
codegen_flags: <defaults>
</compile_context>

<pallas_src>
import functools

import jax
import jax.numpy as jnp
from jax import lax
from jax.experimental import pallas as pl
from jax.experimental.pallas import tpu as pltpu


def _shader_kernel(p2f_ref, bary_ref, facecol_ref, bg_ref, out_ref, *,
                   face_chunk):
    # p2f_ref:     (8, TL)       int32    pix_to_face at k=0 (-1 == background)
    # bary_ref:    (3, 8, TL)    float32  barycentric coords at k=0
    # facecol_ref: (3*C, F_pad)  bfloat16 per-face vertex colors * 0.5, rows = v*C + c
    # bg_ref:      (C, 1)        float32  background color * 0.5
    # out_ref:     (C+1, 8, TL)  float32  RGBA / 2
    C = bg_ref.shape[0]
    F_pad = facecol_ref.shape[1]
    n_chunks = F_pad // face_chunk

    p2f = p2f_ref[...]                   # (8, TL)
    bary = bary_ref[...]                 # (3, 8, TL)
    face_cols = facecol_ref[...]         # (3C, F_pad) bf16
    bg = bg_ref[...]                     # (C, 1)

    # Per-chunk face-id columns, built once as (FC, 1) (not (F, TP)).
    chunk_ids = [
        lax.broadcasted_iota(jnp.int32, (face_chunk, 1), 0) + ci * face_chunk
        for ci in range(n_chunks)
    ]

    # Process the 8 sublane rows of the pixel tile independently so the
    # data-dependent gather stays a plain 2-D (3C, FC) x (FC, TL) MXU matmul
    # with pixels lane-dense, while the HBM blocks stay fully sublane-dense.
    for r in range(8):
        p2f_r = p2f[r:r + 1, :]                                     # (1, TL)

        # TODO(synk): for very large F (real meshes, 1e4+ faces) replace the
        # O(F)-per-pixel one-hot with an XLA wrapper gather or a manual DMA /
        # scalar-prefetch gather so the face table need not be VMEM-resident.
        gathered = None                                             # (3C, TL) f32
        for ci in range(n_chunks):
            f0 = ci * face_chunk
            one_hot = (chunk_ids[ci] == p2f_r).astype(jnp.bfloat16)  # (FC, TL)
            part = jnp.dot(face_cols[:, f0:f0 + face_chunk], one_hot,
                           preferred_element_type=jnp.float32)       # (3C, TL)
            gathered = part if gathered is None else gathered + part

        # Barycentric interpolation (texture sampling) for this pixel row.
        texel = (bary[0:1, r, :] * gathered[0:C, :]
                 + bary[1:2, r, :] * gathered[C:2 * C, :]
                 + bary[2:3, r, :] * gathered[2 * C:3 * C, :])        # (C, TL)

        # hard_rgb_blend: background where pix_to_face[..., 0] < 0; alpha chan.
        # The "/ 2.0" is folded into face_cols / bg / the 0.5 alpha.
        is_bg = p2f_r < 0                                             # (1, TL)
        out_ref[0:C, r, :] = jnp.where(is_bg, bg, texel)              # (C, TL)
        out_ref[C:C + 1, r, :] = jnp.where(is_bg, jnp.float32(0.0),
                                           jnp.float32(0.5))          # (1, TL)


def simple_shader_pallas(pix_to_face, bary_coords, face_vertex_colors,
                         background_color, *, tile_pixels=16384,
                         face_chunk=256):
    """JAX/Pallas equivalent of SimpleShader.forward.

    pix_to_face:        (N, H, W, K) int32
    bary_coords:        (N, H, W, K, 3) float32
    face_vertex_colors: (F, 3, C) float32   (per-face, per-vertex colors)
    background_color:   (C,) float32
    returns:            (N, H, W, C+1) float32  (RGBA / 2)
    """
    N, H, W, K = pix_to_face.shape
    F, V, C = face_vertex_colors.shape
    assert V == 3, "expected 3 barycentric vertices per face"
    assert tile_pixels % 1024 == 0, "pixel tile must be 8 sublanes x 128 lanes"

    P = N * H * W
    TP = tile_pixels
    P_pad = -(-P // TP) * TP
    cols = P_pad // 8          # pixel columns per sublane row
    TL = TP // 8               # lanes per block (multiple of 128)

    # k=0 selection + channel-major, sublane-dense (8, P/8) pixel layout.
    # TODO(synk): in a full render pipeline keep the rasterizer output and the
    # image consumer channel-major so these relayout passes (and the final
    # transpose) disappear; they only exist here to match the PyTorch3D
    # (N, H, W, ...) tensor interface.
    p2f0 = pix_to_face[..., 0].reshape(P).astype(jnp.int32)              # (P,)
    bary0 = bary_coords[..., 0, :].reshape(P, 3).T.astype(jnp.float32)   # (3, P)
    if P_pad != P:
        pad = P_pad - P
        p2f0 = jnp.pad(p2f0, (0, pad), constant_values=-1)
        bary0 = jnp.pad(bary0, ((0, 0), (0, pad)))
    p2f2d = p2f0.reshape(8, cols)                                         # (8, P/8)
    bary2d = bary0.reshape(3, 8, cols)                                    # (3, 8, P/8)

    # Face-color table: (3C, F_pad) bf16, pre-scaled by 0.5 (folds the trailing
    # "/ 2.0"; exact since barycentric weights sum to 1).  Padded face columns
    # are zero and their ids never match pix_to_face, so they contribute 0.
    if F <= face_chunk:
        chunk = max(8, -(-F // 8) * 8)
    else:
        chunk = face_chunk
    F_pad = -(-F // chunk) * chunk
    facecol = (face_vertex_colors.reshape(F, 3 * C).T.astype(jnp.float32)
               * jnp.float32(0.5))                                        # (3C, F)
    facecol = jnp.pad(facecol, ((0, 0), (0, F_pad - F))).astype(jnp.bfloat16)
    bg = (background_color.reshape(C, 1).astype(jnp.float32)
          * jnp.float32(0.5))                                             # (C, 1)

    out2d = pl.pallas_call(
        functools.partial(_shader_kernel, face_chunk=chunk),
        out_shape=jax.ShapeDtypeStruct((C + 1, 8, cols), jnp.float32),
        grid=(P_pad // TP,),
        in_specs=[
            pl.BlockSpec((8, TL), lambda i: (0, i)),            # pix_to_face k=0
            pl.BlockSpec((3, 8, TL), lambda i: (0, 0, i)),      # bary k=0
            pl.BlockSpec((3 * C, F_pad), lambda i: (0, 0)),     # face colors (resident)
            pl.BlockSpec((C, 1), lambda i: (0, 0)),             # background (resident)
        ],
        out_specs=pl.BlockSpec((C + 1, 8, TL), lambda i: (0, 0, i)),
        compiler_params=pltpu.CompilerParams(
            dimension_semantics=("parallel",),
            vmem_limit_bytes=32 * 1024 * 1024),
    )(p2f2d, bary2d, facecol, bg)

    # Back to the PyTorch3D image layout (N, H, W, C+1).
    return out2d.reshape(C + 1, P_pad)[:, :P].T.reshape(N, H, W, C + 1)


def _reference(pix_to_face, bary_coords, face_vertex_colors, background_color):
    # Pure-JAX reference mirroring sample_textures + hard_rgb_blend + /2.
    p2f0 = pix_to_face[..., 0]                                  # (N,H,W)
    bary0 = bary_coords[..., 0, :]                              # (N,H,W,3)
    safe = jnp.maximum(p2f0, 0)
    face_cols = face_vertex_colors[safe]                        # (N,H,W,3,C)
    texel = jnp.einsum("nhwv,nhwvc->nhwc", bary0, face_cols)
    is_bg = (p2f0 < 0)[..., None]
    rgb = jnp.where(is_bg, background_color[None, None, None, :], texel)
    alpha = jnp.where(is_bg, 0.0, 1.0)
    return jnp.concatenate([rgb, alpha], axis=-1) / 2.0


if __name__ == "__main__":
    key = jax.random.PRNGKey(0)
    k1, k2, k3 = jax.random.split(key, 3)

    N, H, W, K, F, C = 2, 32, 32, 2, 8, 3

    pix_to_face = jax.random.randint(k1, (N, H, W, K), minval=-1, maxval=F,
                                     dtype=jnp.int32)
    bary_raw = jax.random.uniform(k2, (N, H, W, K, 3), dtype=jnp.float32) + 1e-3
    bary_coords = bary_raw / jnp.sum(bary_raw, axis=-1, keepdims=True)
    face_vertex_colors = jax.random.uniform(k3, (F, 3, C), dtype=jnp.float32)
    background_color = jnp.array([1.0, 1.0, 1.0], dtype=jnp.float32)  # BlendParams default

    # Small tile so the demo exercises a multi-step pipelined grid
    # (P = 2*32*32 = 2048 pixels -> 2 grid steps at 1024 px/step); the
    # production default is tile_pixels=16384.
    out = simple_shader_pallas(pix_to_face, bary_coords, face_vertex_colors,
                               background_color, tile_pixels=1024)
    out = jax.block_until_ready(out)

    ref = _reference(pix_to_face, bary_coords, face_vertex_colors,
                     background_color)
    assert out.shape == (N, H, W, C + 1)
    # Face colors go through the MXU in bfloat16 (per the perf review), so
    # foreground RGB carries ~1e-3 abs error; background and alpha are exact.
    assert jnp.allclose(out, ref, atol=5e-3, rtol=0.0), \
        float(jnp.max(jnp.abs(out - ref)))

    print("KERNEL_OK")
</pallas_src>

<mosaic_0001>
module attributes {stable_mosaic.version = 11 : i64} {
  func.func @_shader_kernel(%arg0: i32, %arg1: memref<8x128xi32, #tpu.memory_space<vmem>>, %arg2: memref<3x8x128xf32, #tpu.memory_space<vmem>>, %arg3: memref<9x8xbf16, #tpu.memory_space<vmem>>, %arg4: memref<3x1xf32, #tpu.memory_space<vmem>>, %arg5: memref<4x8x128xf32, #tpu.memory_space<vmem>>) attributes {dimension_semantics = [#tpu.dimension_semantics<parallel>], iteration_bounds = array<i64: 2>, scalar_prefetch = 0 : i64, scratch_operands = 0 : i64, tpu.core_type = #tpu.core_type<tc>, window_params = [{transform_indices = @transform_0, window_bounds = array<i64: 8, 128>}, {transform_indices = @transform_1, window_bounds = array<i64: 3, 8, 128>}, {pipeline_mode = #tpu.pipeline_mode<synchronous>, transform_indices = @transform_2, window_bounds = array<i64: 9, 8>}, {pipeline_mode = #tpu.pipeline_mode<synchronous>, transform_indices = @transform_3, window_bounds = array<i64: 3, 1>}, {transform_indices = @transform_4, window_bounds = array<i64: 4, 8, 128>}]} {
    %c0 = arith.constant 0 : index
    %c0_0 = arith.constant 0 : index
    %0 = vector.load %arg1[%c0, %c0_0] : memref<8x128xi32, #tpu.memory_space<vmem>>, vector<8x128xi32>
    %c0_1 = arith.constant 0 : index
    %c0_2 = arith.constant 0 : index
    %c0_3 = arith.constant 0 : index
    %1 = vector.load %arg2[%c0_1, %c0_2, %c0_3] : memref<3x8x128xf32, #tpu.memory_space<vmem>>, vector<3x8x128xf32>
    %c0_4 = arith.constant 0 : index
    %c0_5 = arith.constant 0 : index
    %2 = vector.load %arg3[%c0_4, %c0_5] : memref<9x8xbf16, #tpu.memory_space<vmem>>, vector<9x8xbf16>
    %c0_6 = arith.constant 0 : index
    %c0_7 = arith.constant 0 : index
    %3 = vector.load %arg4[%c0_6, %c0_7] : memref<3x1xf32, #tpu.memory_space<vmem>>, vector<3x1xf32>
    %4 = tpu.iota {dimensions = array<i32: 0>} : vector<8x1xi32>
    %c0_i32 = arith.constant 0 : i32
    %5 = vector.broadcast %c0_i32 : i32 to vector<8x1xi32>
    %6 = arith.addi %4, %5 : vector<8x1xi32>
    %7 = vector.extract_strided_slice %0 {offsets = [0, 0], sizes = [1, 128], strides = [1, 1]} : vector<8x128xi32> to vector<1x128xi32>
    %8 = vector.broadcast %6 : vector<8x1xi32> to vector<8x128xi32>
    %9 = vector.broadcast %7 : vector<1x128xi32> to vector<8x128xi32>
    %10 = arith.cmpi eq, %8, %9 : vector<8x128xi32>
    %11 = arith.extui %10 : vector<8x128xi1> to vector<8x128xi32>
    %12 = arith.sitofp %11 : vector<8x128xi32> to vector<8x128xf32>
    %13 = arith.truncf %12 : vector<8x128xf32> to vector<8x128xbf16>
    %cst = arith.constant dense<0.000000e+00> : vector<9x128xf32>
    %14 = tpu.matmul %2, %13, %cst {dimension_numbers = #tpu.dot_dimension_numbers<[1], [0], [0], [1], [0, 0, 1, 1], [], []>} : vector<9x8xbf16>, vector<8x128xbf16>, vector<9x128xf32> -> vector<9x128xf32>
    %15 = vector.extract_strided_slice %1 {offsets = [0, 0, 0], sizes = [1, 1, 128], strides = [1, 1, 1]} : vector<3x8x128xf32> to vector<1x1x128xf32>
    %16 = vector.shape_cast %15 : vector<1x1x128xf32> to vector<1x128xf32>
    %17 = vector.extract_strided_slice %14 {offsets = [0, 0], sizes = [3, 128], strides = [1, 1]} : vector<9x128xf32> to vector<3x128xf32>
    %18 = vector.broadcast %16 : vector<1x128xf32> to vector<3x128xf32>
    %19 = arith.mulf %18, %17 : vector<3x128xf32>
    %20 = vector.extract_strided_slice %1 {offsets = [1, 0, 0], sizes = [1, 1, 128], strides = [1, 1, 1]} : vector<3x8x128xf32> to vector<1x1x128xf32>
    %21 = vector.shape_cast %20 : vector<1x1x128xf32> to vector<1x128xf32>
    %22 = vector.extract_strided_slice %14 {offsets = [3, 0], sizes = [3, 128], strides = [1, 1]} : vector<9x128xf32> to vector<3x128xf32>
    %23 = vector.broadcast %21 : vector<1x128xf32> to vector<3x128xf32>
    %24 = arith.mulf %23, %22 : vector<3x128xf32>
    %25 = arith.addf %19, %24 : vector<3x128xf32>
    %26 = vector.extract_strided_slice %1 {offsets = [2, 0, 0], sizes = [1, 1, 128], strides = [1, 1, 1]} : vector<3x8x128xf32> to vector<1x1x128xf32>
    %27 = vector.shape_cast %26 : vector<1x1x128xf32> to vector<1x128xf32>
    %28 = vector.extract_strided_slice %14 {offsets = [6, 0], sizes = [3, 128], strides = [1, 1]} : vector<9x128xf32> to vector<3x128xf32>
    %29 = vector.broadcast %27 : vector<1x128xf32> to vector<3x128xf32>
    %30 = arith.mulf %29, %28 : vector<3x128xf32>
    %31 = arith.addf %25, %30 : vector<3x128xf32>
    %c0_i32_8 = arith.constant 0 : i32
    %32 = vector.broadcast %c0_i32_8 : i32 to vector<1x128xi32>
    %33 = arith.cmpi slt, %7, %32 : vector<1x128xi32>
    %34 = vector.shape_cast %33 : vector<1x128xi1> to vector<1x128xi1>
    %35 = vector.broadcast %34 : vector<1x128xi1> to vector<3x128xi1>
    %36 = vector.shape_cast %3 : vector<3x1xf32> to vector<3x1xf32>
    %37 = vector.broadcast %36 : vector<3x1xf32> to vector<3x128xf32>
    %38 = arith.select %35, %37, %31 : vector<3x128xi1>, vector<3x128xf32>
    %c0_9 = arith.constant 0 : index
    %c0_10 = arith.constant 0 : index
    %c0_11 = arith.constant 0 : index
    %39 = vector.load %arg5[%c0_9, %c0_10, %c0_11] : memref<4x8x128xf32, #tpu.memory_space<vmem>>, vector<3x1x128xf32>
    %40 = vector.shape_cast %39 : vector<3x1x128xf32> to vector<3x128xf32>
    %41 = vector.shape_cast %38 : vector<3x128xf32> to vector<3x1x128xf32>
    tpu.vector_store %arg5[%c0_9, %c0_10, %c0_11], %41 {strides = array<i32>} : memref<4x8x128xf32, #tpu.memory_space<vmem>>, vector<3x1x128xf32>,
    %cst_12 = arith.constant 0.000000e+00 : f32
    %cst_13 = arith.constant 5.000000e-01 : f32
    %42 = vector.broadcast %cst_12 : f32 to vector<1x128xf32>
    %43 = vector.broadcast %cst_13 : f32 to vector<1x128xf32>
    %44 = arith.select %33, %42, %43 : vector<1x128xi1>, vector<1x128xf32>
    %c3 = arith.constant 3 : index
    %c0_14 = arith.constant 0 : index
    %c0_15 = arith.constant 0 : index
    %45 = vector.load %arg5[%c3, %c0_14, %c0_15] : memref<4x8x128xf32, #tpu.memory_space<vmem>>, vector<1x1x128xf32>
    %46 = vector.shape_cast %45 : vector<1x1x128xf32> to vector<1x128xf32>
    %47 = vector.shape_cast %44 : vector<1x128xf32> to vector<1x1x128xf32>
    tpu.vector_store %arg5[%c3, %c0_14, %c0_15], %47 {strides = array<i32>} : memref<4x8x128xf32, #tpu.memory_space<vmem>>, vector<1x1x128xf32>,
    %48 = vector.extract_strided_slice %0 {offsets = [1, 0], sizes = [1, 128], strides = [1, 1]} : vector<8x128xi32> to vector<1x128xi32>
    %49 = vector.broadcast %6 : vector<8x1xi32> to vector<8x128xi32>
    %50 = vector.broadcast %48 : vector<1x128xi32> to vector<8x128xi32>
    %51 = arith.cmpi eq, %49, %50 : vector<8x128xi32>
    %52 = arith.extui %51 : vector<8x128xi1> to vector<8x128xi32>
    %53 = arith.sitofp %52 : vector<8x128xi32> to vector<8x128xf32>
    %54 = arith.truncf %53 : vector<8x128xf32> to vector<8x128xbf16>
    %cst_16 = arith.constant dense<0.000000e+00> : vector<9x128xf32>
    %55 = tpu.matmul %2, %54, %cst_16 {dimension_numbers = #tpu.dot_dimension_numbers<[1], [0], [0], [1], [0, 0, 1, 1], [], []>} : vector<9x8xbf16>, vector<8x128xbf16>, vector<9x128xf32> -> vector<9x128xf32>
    %56 = vector.extract_strided_slice %1 {offsets = [0, 1, 0], sizes = [1, 1, 128], strides = [1, 1, 1]} : vector<3x8x128xf32> to vector<1x1x128xf32>
    %57 = vector.shape_cast %56 : vector<1x1x128xf32> to vector<1x128xf32>
    %58 = vector.extract_strided_slice %55 {offsets = [0, 0], sizes = [3, 128], strides = [1, 1]} : vector<9x128xf32> to vector<3x128xf32>
    %59 = vector.broadcast %57 : vector<1x128xf32> to vector<3x128xf32>
    %60 = arith.mulf %59, %58 : vector<3x128xf32>
    %61 = vector.extract_strided_slice %1 {offsets = [1, 1, 0], sizes = [1, 1, 128], strides = [1, 1, 1]} : vector<3x8x128xf32> to vector<1x1x128xf32>
    %62 = vector.shape_cast %61 : vector<1x1x128xf32> to vector<1x128xf32>
    %63 = vector.extract_strided_slice %55 {offsets = [3, 0], sizes = [3, 128], strides = [1, 1]} : vector<9x128xf32> to vector<3x128xf32>
    %64 = vector.broadcast %62 : vector<1x128xf32> to vector<3x128xf32>
    %65 = arith.mulf %64, %63 : vector<3x128xf32>
    %66 = arith.addf %60, %65 : vector<3x128xf32>
    %67 = vector.extract_strided_slice %1 {offsets = [2, 1, 0], sizes = [1, 1, 128], strides = [1, 1, 1]} : vector<3x8x128xf32> to vector<1x1x128xf32>
    %68 = vector.shape_cast %67 : vector<1x1x128xf32> to vector<1x128xf32>
    %69 = vector.extract_strided_slice %55 {offsets = [6, 0], sizes = [3, 128], strides = [1, 1]} : vector<9x128xf32> to vector<3x128xf32>
    %70 = vector.broadcast %68 : vector<1x128xf32> to vector<3x128xf32>
    %71 = arith.mulf %70, %69 : vector<3x128xf32>
    %72 = arith.addf %66, %71 : vector<3x128xf32>
    %c0_i32_17 = arith.constant 0 : i32
    %73 = vector.broadcast %c0_i32_17 : i32 to vector<1x128xi32>
    %74 = arith.cmpi slt, %48, %73 : vector<1x128xi32>
    %75 = vector.shape_cast %74 : vector<1x128xi1> to vector<1x128xi1>
    %76 = vector.broadcast %75 : vector<1x128xi1> to vector<3x128xi1>
    %77 = vector.shape_cast %3 : vector<3x1xf32> to vector<3x1xf32>
    %78 = vector.broadcast %77 : vector<3x1xf32> to vector<3x128xf32>
    %79 = arith.select %76, %78, %72 : vector<3x128xi1>, vector<3x128xf32>
    %c0_18 = arith.constant 0 : index
    %c1 = arith.constant 1 : index
    %c0_19 = arith.constant 0 : index
    %80 = vector.load %arg5[%c0_18, %c1, %c0_19] : memref<4x8x128xf32, #tpu.memory_space<vmem>>, vector<3x1x128xf32>
    %81 = vector.shape_cast %80 : vector<3x1x128xf32> to vector<3x128xf32>
    %82 = vector.shape_cast %79 : vector<3x128xf32> to vector<3x1x128xf32>
    tpu.vector_store %arg5[%c0_18, %c1, %c0_19], %82 {strides = array<i32>} : memref<4x8x128xf32, #tpu.memory_space<vmem>>, vector<3x1x128xf32>,
    %cst_20 = arith.constant 0.000000e+00 : f32
    %cst_21 = arith.constant 5.000000e-01 : f32
    %83 = vector.broadcast %cst_20 : f32 to vector<1x128xf32>
    %84 = vector.broadcast %cst_21 : f32 to vector<1x128xf32>
    %85 = arith.select %74, %83, %84 : vector<1x128xi1>, vector<1x128xf32>
    %c3_22 = arith.constant 3 : index
    %c1_23 = arith.constant 1 : index
    %c0_24 = arith.constant 0 : index
    %86 = vector.load %arg5[%c3_22, %c1_23, %c0_24] : memref<4x8x128xf32, #tpu.memory_space<vmem>>, vector<1x1x128xf32>
    %87 = vector.shape_cast %86 : vector<1x1x128xf32> to vector<1x128xf32>
    %88 = vector.shape_cast %85 : vector<1x128xf32> to vector<1x1x128xf32>
    tpu.vector_store %arg5[%c3_22, %c1_23, %c0_24], %88 {strides = array<i32>} : memref<4x8x128xf32, #tpu.memory_space<vmem>>, vector<1x1x128xf32>,
    %89 = vector.extract_strided_slice %0 {offsets = [2, 0], sizes = [1, 128], strides = [1, 1]} : vector<8x128xi32> to vector<1x128xi32>
    %90 = vector.broadcast %6 : vector<8x1xi32> to vector<8x128xi32>
    %91 = vector.broadcast %89 : vector<1x128xi32> to vector<8x128xi32>
    %92 = arith.cmpi eq, %90, %91 : vector<8x128xi32>
    %93 = arith.extui %92 : vector<8x128xi1> to vector<8x128xi32>
    %94 = arith.sitofp %93 : vector<8x128xi32> to vector<8x128xf32>
    %95 = arith.truncf %94 : vector<8x128xf32> to vector<8x128xbf16>
    %cst_25 = arith.constant dense<0.000000e+00> : vector<9x128xf32>
    %96 = tpu.matmul %2, %95, %cst_25 {dimension_numbers = #tpu.dot_dimension_numbers<[1], [0], [0], [1], [0, 0, 1, 1], [], []>} : vector<9x8xbf16>, vector<8x128xbf16>, vector<9x128xf32> -> vector<9x128xf32>
    %97 = vector.extract_strided_slice %1 {offsets = [0, 2, 0], sizes = [1, 1, 128], strides = [1, 1, 1]} : vector<3x8x128xf32> to vector<1x1x128xf32>
    %98 = vector.shape_cast %97 : vector<1x1x128xf32> to vector<1x128xf32>
    %99 = vector.extract_strided_slice %96 {offsets = [0, 0], sizes = [3, 128], strides = [1, 1]} : vector<9x128xf32> to vector<3x128xf32>
    %100 = vector.broadcast %98 : vector<1x128xf32> to vector<3x128xf32>
    %101 = arith.mulf %100, %99 : vector<3x128xf32>
    %102 = vector.extract_strided_slice %1 {offsets = [1, 2, 0], sizes = [1, 1, 128], strides = [1, 1, 1]} : vector<3x8x128xf32> to vector<1x1x128xf32>
    %103 = vector.shape_cast %102 : vector<1x1x128xf32> to vector<1x128xf32>
    %104 = vector.extract_strided_slice %96 {offsets = [3, 0], sizes = [3, 128], strides = [1, 1]} : vector<9x128xf32> to vector<3x128xf32>
    %105 = vector.broadcast %103 : vector<1x128xf32> to vector<3x128xf32>
    %106 = arith.mulf %105, %104 : vector<3x128xf32>
    %107 = arith.addf %101, %106 : vector<3x128xf32>
    %108 = vector.extract_strided_slice %1 {offsets = [2, 2, 0], sizes = [1, 1, 128], strides = [1, 1, 1]} : vector<3x8x128xf32> to vector<1x1x128xf32>
    %109 = vector.shape_cast %108 : vector<1x1x128xf32> to vector<1x128xf32>
    %110 = vector.extract_strided_slice %96 {offsets = [6, 0], sizes = [3, 128], strides = [1, 1]} : vector<9x128xf32> to vector<3x128xf32>
    %111 = vector.broadcast %109 : vector<1x128xf32> to vector<3x128xf32>
    %112 = arith.mulf %111, %110 : vector<3x128xf32>
    %113 = arith.addf %107, %112 : vector<3x128xf32>
    %c0_i32_26 = arith.constant 0 : i32
    %114 = vector.broadcast %c0_i32_26 : i32 to vector<1x128xi32>
    %115 = arith.cmpi slt, %89, %114 : vector<1x128xi32>
    %116 = vector.shape_cast %115 : vector<1x128xi1> to vector<1x128xi1>
    %117 = vector.broadcast %116 : vector<1x128xi1> to vector<3x128xi1>
    %118 = vector.shape_cast %3 : vector<3x1xf32> to vector<3x1xf32>
    %119 = vector.broadcast %118 : vector<3x1xf32> to vector<3x128xf32>
    %120 = arith.select %117, %119, %113 : vector<3x128xi1>, vector<3x128xf32>
    %c0_27 = arith.constant 0 : index
    %c2 = arith.constant 2 : index
    %c0_28 = arith.constant 0 : index
    %121 = vector.load %arg5[%c0_27, %c2, %c0_28] : memref<4x8x128xf32, #tpu.memory_space<vmem>>, vector<3x1x128xf32>
    %122 = vector.shape_cast %121 : vector<3x1x128xf32> to vector<3x128xf32>
    %123 = vector.shape_cast %120 : vector<3x128xf32> to vector<3x1x128xf32>
    tpu.vector_store %arg5[%c0_27, %c2, %c0_28], %123 {strides = array<i32>} : memref<4x8x128xf32, #tpu.memory_space<vmem>>, vector<3x1x128xf32>,
    %cst_29 = arith.constant 0.000000e+00 : f32
    %cst_30 = arith.constant 5.000000e-01 : f32
    %124 = vector.broadcast %cst_29 : f32 to vector<1x128xf32>
    %125 = vector.broadcast %cst_30 : f32 to vector<1x128xf32>
    %126 = arith.select %115, %124, %125 : vector<1x128xi1>, vector<1x128xf32>
    %c3_31 = arith.constant 3 : index
    %c2_32 = arith.constant 2 : index
    %c0_33 = arith.constant 0 : index
    %127 = vector.load %arg5[%c3_31, %c2_32, %c0_33] : memref<4x8x128xf32, #tpu.memory_space<vmem>>, vector<1x1x128xf32>
    %128 = vector.shape_cast %127 : vector<1x1x128xf32> to vector<1x128xf32>
    %129 = vector.shape_cast %126 : vector<1x128xf32> to vector<1x1x128xf32>
    tpu.vector_store %arg5[%c3_31, %c2_32, %c0_33], %129 {strides = array<i32>} : memref<4x8x128xf32, #tpu.memory_space<vmem>>, vector<1x1x128xf32>,
    %130 = vector.extract_strided_slice %0 {offsets = [3, 0], sizes = [1, 128], strides = [1, 1]} : vector<8x128xi32> to vector<1x128xi32>
    %131 = vector.broadcast %6 : vector<8x1xi32> to vector<8x128xi32>
    %132 = vector.broadcast %130 : vector<1x128xi32> to vector<8x128xi32>
    %133 = arith.cmpi eq, %131, %132 : vector<8x128xi32>
    %134 = arith.extui %133 : vector<8x128xi1> to vector<8x128xi32>
    %135 = arith.sitofp %134 : vector<8x128xi32> to vector<8x128xf32>
    %136 = arith.truncf %135 : vector<8x128xf32> to vector<8x128xbf16>
    %cst_34 = arith.constant dense<0.000000e+00> : vector<9x128xf32>
    %137 = tpu.matmul %2, %136, %cst_34 {dimension_numbers = #tpu.dot_dimension_numbers<[1], [0], [0], [1], [0, 0, 1, 1], [], []>} : vector<9x8xbf16>, vector<8x128xbf16>, vector<9x128xf32> -> vector<9x128xf32>
    %138 = vector.extract_strided_slice %1 {offsets = [0, 3, 0], sizes = [1, 1, 128], strides = [1, 1, 1]} : vector<3x8x128xf32> to vector<1x1x128xf32>
    %139 = vector.shape_cast %138 : vector<1x1x128xf32> to vector<1x128xf32>
    %140 = vector.extract_strided_slice %137 {offsets = [0, 0], sizes = [3, 128], strides = [1, 1]} : vector<9x128xf32> to vector<3x128xf32>
    %141 = vector.broadcast %139 : vector<1x128xf32> to vector<3x128xf32>
    %142 = arith.mulf %141, %140 : vector<3x128xf32>
    %143 = vector.extract_strided_slice %1 {offsets = [1, 3, 0], sizes = [1, 1, 128], strides = [1, 1, 1]} : vector<3x8x128xf32> to vector<1x1x128xf32>
    %144 = vector.shape_cast %143 : vector<1x1x128xf32> to vector<1x128xf32>
    %145 = vector.extract_strided_slice %137 {offsets = [3, 0], sizes = [3, 128], strides = [1, 1]} : vector<9x128xf32> to vector<3x128xf32>
    %146 = vector.broadcast %144 : vector<1x128xf32> to vector<3x128xf32>
    %147 = arith.mulf %146, %145 : vector<3x128xf32>
    %148 = arith.addf %142, %147 : vector<3x128xf32>
    %149 = vector.extract_strided_slice %1 {offsets = [2, 3, 0], sizes = [1, 1, 128], strides = [1, 1, 1]} : vector<3x8x128xf32> to vector<1x1x128xf32>
    %150 = vector.shape_cast %149 : vector<1x1x128xf32> to vector<1x128xf32>
    %151 = vector.extract_strided_slice %137 {offsets = [6, 0], sizes = [3, 128], strides = [1, 1]} : vector<9x128xf32> to vector<3x128xf32>
    %152 = vector.broadcast %150 : vector<1x128xf32> to vector<3x128xf32>
    %153 = arith.mulf %152, %151 : vector<3x128xf32>
    %154 = arith.addf %148, %153 : vector<3x128xf32>
    %c0_i32_35 = arith.constant 0 : i32
    %155 = vector.broadcast %c0_i32_35 : i32 to vector<1x128xi32>
    %156 = arith.cmpi slt, %130, %155 : vector<1x128xi32>
    %157 = vector.shape_cast %156 : vector<1x128xi1> to vector<1x128xi1>
    %158 = vector.broadcast %157 : vector<1x128xi1> to vector<3x128xi1>
    %159 = vector.shape_cast %3 : vector<3x1xf32> to vector<3x1xf32>
    %160 = vector.broadcast %159 : vector<3x1xf32> to vector<3x128xf32>
    %161 = arith.select %158, %160, %154 : vector<3x128xi1>, vector<3x128xf32>
    %c0_36 = arith.constant 0 : index
    %c3_37 = arith.constant 3 : index
    %c0_38 = arith.constant 0 : index
    %162 = vector.load %arg5[%c0_36, %c3_37, %c0_38] : memref<4x8x128xf32, #tpu.memory_space<vmem>>, vector<3x1x128xf32>
    %163 = vector.shape_cast %162 : vector<3x1x128xf32> to vector<3x128xf32>
    %164 = vector.shape_cast %161 : vector<3x128xf32> to vector<3x1x128xf32>
    tpu.vector_store %arg5[%c0_36, %c3_37, %c0_38], %164 {strides = array<i32>} : memref<4x8x128xf32, #tpu.memory_space<vmem>>, vector<3x1x128xf32>,
    %cst_39 = arith.constant 0.000000e+00 : f32
    %cst_40 = arith.constant 5.000000e-01 : f32
    %165 = vector.broadcast %cst_39 : f32 to vector<1x128xf32>
    %166 = vector.broadcast %cst_40 : f32 to vector<1x128xf32>
    %167 = arith.select %156, %165, %166 : vector<1x128xi1>, vector<1x128xf32>
    %c3_41 = arith.constant 3 : index
    %c3_42 = arith.constant 3 : index
    %c0_43 = arith.constant 0 : index
    %168 = vector.load %arg5[%c3_41, %c3_42, %c0_43] : memref<4x8x128xf32, #tpu.memory_space<vmem>>, vector<1x1x128xf32>
    %169 = vector.shape_cast %168 : vector<1x1x128xf32> to vector<1x128xf32>
    %170 = vector.shape_cast %167 : vector<1x128xf32> to vector<1x1x128xf32>
    tpu.vector_store %arg5[%c3_41, %c3_42, %c0_43], %170 {strides = array<i32>} : memref<4x8x128xf32, #tpu.memory_space<vmem>>, vector<1x1x128xf32>,
    %171 = vector.extract_strided_slice %0 {offsets = [4, 0], sizes = [1, 128], strides = [1, 1]} : vector<8x128xi32> to vector<1x128xi32>
    %172 = vector.broadcast %6 : vector<8x1xi32> to vector<8x128xi32>
    %173 = vector.broadcast %171 : vector<1x128xi32> to vector<8x128xi32>
    %174 = arith.cmpi eq, %172, %173 : vector<8x128xi32>
    %175 = arith.extui %174 : vector<8x128xi1> to vector<8x128xi32>
    %176 = arith.sitofp %175 : vector<8x128xi32> to vector<8x128xf32>
    %177 = arith.truncf %176 : vector<8x128xf32> to vector<8x128xbf16>
    %cst_44 = arith.constant dense<0.000000e+00> : vector<9x128xf32>
    %178 = tpu.matmul %2, %177, %cst_44 {dimension_numbers = #tpu.dot_dimension_numbers<[1], [0], [0], [1], [0, 0, 1, 1], [], []>} : vector<9x8xbf16>, vector<8x128xbf16>, vector<9x128xf32> -> vector<9x128xf32>
    %179 = vector.extract_strided_slice %1 {offsets = [0, 4, 0], sizes = [1, 1, 128], strides = [1, 1, 1]} : vector<3x8x128xf32> to vector<1x1x128xf32>
    %180 = vector.shape_cast %179 : vector<1x1x128xf32> to vector<1x128xf32>
    %181 = vector.extract_strided_slice %178 {offsets = [0, 0], sizes = [3, 128], strides = [1, 1]} : vector<9x128xf32> to vector<3x128xf32>
    %182 = vector.broadcast %180 : vector<1x128xf32> to vector<3x128xf32>
    %183 = arith.mulf %182, %181 : vector<3x128xf32>
    %184 = vector.extract_strided_slice %1 {offsets = [1, 4, 0], sizes = [1, 1, 128], strides = [1, 1, 1]} : vector<3x8x128xf32> to vector<1x1x128xf32>
    %185 = vector.shape_cast %184 : vector<1x1x128xf32> to vector<1x128xf32>
    %186 = vector.extract_strided_slice %178 {offsets = [3, 0], sizes = [3, 128], strides = [1, 1]} : vector<9x128xf32> to vector<3x128xf32>
    %187 = vector.broadcast %185 : vector<1x128xf32> to vector<3x128xf32>
    %188 = arith.mulf %187, %186 : vector<3x128xf32>
    %189 = arith.addf %183, %188 : vector<3x128xf32>
    %190 = vector.extract_strided_slice %1 {offsets = [2, 4, 0], sizes = [1, 1, 128], strides = [1, 1, 1]} : vector<3x8x128xf32> to vector<1x1x128xf32>
    %191 = vector.shape_cast %190 : vector<1x1x128xf32> to vector<1x128xf32>
    %192 = vector.extract_strided_slice %178 {offsets = [6, 0], sizes = [3, 128], strides = [1, 1]} : vector<9x128xf32> to vector<3x128xf32>
    %193 = vector.broadcast %191 : vector<1x128xf32> to vector<3x128xf32>
    %194 = arith.mulf %193, %192 : vector<3x128xf32>
    %195 = arith.addf %189, %194 : vector<3x128xf32>
    %c0_i32_45 = arith.constant 0 : i32
    %196 = vector.broadcast %c0_i32_45 : i32 to vector<1x128xi32>
    %197 = arith.cmpi slt, %171, %196 : vector<1x128xi32>
    %198 = vector.shape_cast %197 : vector<1x128xi1> to vector<1x128xi1>
    %199 = vector.broadcast %198 : vector<1x128xi1> to vector<3x128xi1>
    %200 = vector.shape_cast %3 : vector<3x1xf32> to vector<3x1xf32>
    %201 = vector.broadcast %200 : vector<3x1xf32> to vector<3x128xf32>
    %202 = arith.select %199, %201, %195 : vector<3x128xi1>, vector<3x128xf32>
    %c0_46 = arith.constant 0 : index
    %c4 = arith.constant 4 : index
    %c0_47 = arith.constant 0 : index
    %203 = vector.load %arg5[%c0_46, %c4, %c0_47] : memref<4x8x128xf32, #tpu.memory_space<vmem>>, vector<3x1x128xf32>
    %204 = vector.shape_cast %203 : vector<3x1x128xf32> to vector<3x128xf32>
    %205 = vector.shape_cast %202 : vector<3x128xf32> to vector<3x1x128xf32>
    tpu.vector_store %arg5[%c0_46, %c4, %c0_47], %205 {strides = array<i32>} : memref<4x8x128xf32, #tpu.memory_space<vmem>>, vector<3x1x128xf32>,
    %cst_48 = arith.constant 0.000000e+00 : f32
    %cst_49 = arith.constant 5.000000e-01 : f32
    %206 = vector.broadcast %cst_48 : f32 to vector<1x128xf32>
    %207 = vector.broadcast %cst_49 : f32 to vector<1x128xf32>
    %208 = arith.select %197, %206, %207 : vector<1x128xi1>, vector<1x128xf32>
    %c3_50 = arith.constant 3 : index
    %c4_51 = arith.constant 4 : index
    %c0_52 = arith.constant 0 : index
    %209 = vector.load %arg5[%c3_50, %c4_51, %c0_52] : memref<4x8x128xf32, #tpu.memory_space<vmem>>, vector<1x1x128xf32>
    %210 = vector.shape_cast %209 : vector<1x1x128xf32> to vector<1x128xf32>
    %211 = vector.shape_cast %208 : vector<1x128xf32> to vector<1x1x128xf32>
    tpu.vector_store %arg5[%c3_50, %c4_51, %c0_52], %211 {strides = array<i32>} : memref<4x8x128xf32, #tpu.memory_space<vmem>>, vector<1x1x128xf32>,
    %212 = vector.extract_strided_slice %0 {offsets = [5, 0], sizes = [1, 128], strides = [1, 1]} : vector<8x128xi32> to vector<1x128xi32>
    %213 = vector.broadcast %6 : vector<8x1xi32> to vector<8x128xi32>
    %214 = vector.broadcast %212 : vector<1x128xi32> to vector<8x128xi32>
    %215 = arith.cmpi eq, %213, %214 : vector<8x128xi32>
    %216 = arith.extui %215 : vector<8x128xi1> to vector<8x128xi32>
    %217 = arith.sitofp %216 : vector<8x128xi32> to vector<8x128xf32>
    %218 = arith.truncf %217 : vector<8x128xf32> to vector<8x128xbf16>
    %cst_53 = arith.constant dense<0.000000e+00> : vector<9x128xf32>
    %219 = tpu.matmul %2, %218, %cst_53 {dimension_numbers = #tpu.dot_dimension_numbers<[1], [0], [0], [1], [0, 0, 1, 1], [], []>} : vector<9x8xbf16>, vector<8x128xbf16>, vector<9x128xf32> -> vector<9x128xf32>
    %220 = vector.extract_strided_slice %1 {offsets = [0, 5, 0], sizes = [1, 1, 128], strides = [1, 1, 1]} : vector<3x8x128xf32> to vector<1x1x128xf32>
    %221 = vector.shape_cast %220 : vector<1x1x128xf32> to vector<1x128xf32>
    %222 = vector.extract_strided_slice %219 {offsets = [0, 0], sizes = [3, 128], strides = [1, 1]} : vector<9x128xf32> to vector<3x128xf32>
    %223 = vector.broadcast %221 : vector<1x128xf32> to vector<3x128xf32>
    %224 = arith.mulf %223, %222 : vector<3x128xf32>
    %225 = vector.extract_strided_slice %1 {offsets = [1, 5, 0], sizes = [1, 1, 128], strides = [1, 1, 1]} : vector<3x8x128xf32> to vector<1x1x128xf32>
    %226 = vector.shape_cast %225 : vector<1x1x128xf32> to vector<1x128xf32>
    %227 = vector.extract_strided_slice %219 {offsets = [3, 0], sizes = [3, 128], strides = [1, 1]} : vector<9x128xf32> to vector<3x128xf32>
    %228 = vector.broadcast %226 : vector<1x128xf32> to vector<3x128xf32>
    %229 = arith.mulf %228, %227 : vector<3x128xf32>
    %230 = arith.addf %224, %229 : vector<3x128xf32>
    %231 = vector.extract_strided_slice %1 {offsets = [2, 5, 0], sizes = [1, 1, 128], strides = [1, 1, 1]} : vector<3x8x128xf32> to vector<1x1x128xf32>
    %232 = vector.shape_cast %231 : vector<1x1x128xf32> to vector<1x128xf32>
    %233 = vector.extract_strided_slice %219 {offsets = [6, 0], sizes = [3, 128], strides = [1, 1]} : vector<9x128xf32> to vector<3x128xf32>
    %234 = vector.broadcast %232 : vector<1x128xf32> to vector<3x128xf32>
    %235 = arith.mulf %234, %233 : vector<3x128xf32>
    %236 = arith.addf %230, %235 : vector<3x128xf32>
    %c0_i32_54 = arith.constant 0 : i32
    %237 = vector.broadcast %c0_i32_54 : i32 to vector<1x128xi32>
    %238 = arith.cmpi slt, %212, %237 : vector<1x128xi32>
    %239 = vector.shape_cast %238 : vector<1x128xi1> to vector<1x128xi1>
    %240 = vector.broadcast %239 : vector<1x128xi1> to vector<3x128xi1>
    %241 = vector.shape_cast %3 : vector<3x1xf32> to vector<3x1xf32>
    %242 = vector.broadcast %241 : vector<3x1xf32> to vector<3x128xf32>
    %243 = arith.select %240, %242, %236 : vector<3x128xi1>, vector<3x128xf32>
    %c0_55 = arith.constant 0 : index
    %c5 = arith.constant 5 : index
    %c0_56 = arith.constant 0 : index
    %244 = vector.load %arg5[%c0_55, %c5, %c0_56] : memref<4x8x128xf32, #tpu.memory_space<vmem>>, vector<3x1x128xf32>
    %245 = vector.shape_cast %244 : vector<3x1x128xf32> to vector<3x128xf32>
    %246 = vector.shape_cast %243 : vector<3x128xf32> to vector<3x1x128xf32>
    tpu.vector_store %arg5[%c0_55, %c5, %c0_56], %246 {strides = array<i32>} : memref<4x8x128xf32, #tpu.memory_space<vmem>>, vector<3x1x128xf32>,
    %cst_57 = arith.constant 0.000000e+00 : f32
    %cst_58 = arith.constant 5.000000e-01 : f32
    %247 = vector.broadcast %cst_57 : f32 to vector<1x128xf32>
    %248 = vector.broadcast %cst_58 : f32 to vector<1x128xf32>
    %249 = arith.select %238, %247, %248 : vector<1x128xi1>, vector<1x128xf32>
    %c3_59 = arith.constant 3 : index
    %c5_60 = arith.constant 5 : index
    %c0_61 = arith.constant 0 : index
    %250 = vector.load %arg5[%c3_59, %c5_60, %c0_61] : memref<4x8x128xf32, #tpu.memory_space<vmem>>, vector<1x1x128xf32>
    %251 = vector.shape_cast %250 : vector<1x1x128xf32> to vector<1x128xf32>
    %252 = vector.shape_cast %249 : vector<1x128xf32> to vector<1x1x128xf32>
    tpu.vector_store %arg5[%c3_59, %c5_60, %c0_61], %252 {strides = array<i32>} : memref<4x8x128xf32, #tpu.memory_space<vmem>>, vector<1x1x128xf32>,
    %253 = vector.extract_strided_slice %0 {offsets = [6, 0], sizes = [1, 128], strides = [1, 1]} : vector<8x128xi32> to vector<1x128xi32>
    %254 = vector.broadcast %6 : vector<8x1xi32> to vector<8x128xi32>
    %255 = vector.broadcast %253 : vector<1x128xi32> to vector<8x128xi32>
    %256 = arith.cmpi eq, %254, %255 : vector<8x128xi32>
    %257 = arith.extui %256 : vector<8x128xi1> to vector<8x128xi32>
    %258 = arith.sitofp %257 : vector<8x128xi32> to vector<8x128xf32>
    %259 = arith.truncf %258 : vector<8x128xf32> to vector<8x128xbf16>
    %cst_62 = arith.constant dense<0.000000e+00> : vector<9x128xf32>
    %260 = tpu.matmul %2, %259, %cst_62 {dimension_numbers = #tpu.dot_dimension_numbers<[1], [0], [0], [1], [0, 0, 1, 1], [], []>} : vector<9x8xbf16>, vector<8x128xbf16>, vector<9x128xf32> -> vector<9x128xf32>
    %261 = vector.extract_strided_slice %1 {offsets = [0, 6, 0], sizes = [1, 1, 128], strides = [1, 1, 1]} : vector<3x8x128xf32> to vector<1x1x128xf32>
    %262 = vector.shape_cast %261 : vector<1x1x128xf32> to vector<1x128xf32>
    %263 = vector.extract_strided_slice %260 {offsets = [0, 0], sizes = [3, 128], strides = [1, 1]} : vector<9x128xf32> to vector<3x128xf32>
    %264 = vector.broadcast %262 : vector<1x128xf32> to vector<3x128xf32>
    %265 = arith.mulf %264, %263 : vector<3x128xf32>
    %266 = vector.extract_strided_slice %1 {offsets = [1, 6, 0], sizes = [1, 1, 128], strides = [1, 1, 1]} : vector<3x8x128xf32> to vector<1x1x128xf32>
    %267 = vector.shape_cast %266 : vector<1x1x128xf32> to vector<1x128xf32>
    %268 = vector.extract_strided_slice %260 {offsets = [3, 0], sizes = [3, 128], strides = [1, 1]} : vector<9x128xf32> to vector<3x128xf32>
    %269 = vector.broadcast %267 : vector<1x128xf32> to vector<3x128xf32>
    %270 = arith.mulf %269, %268 : vector<3x128xf32>
    %271 = arith.addf %265, %270 : vector<3x128xf32>
    %272 = vector.extract_strided_slice %1 {offsets = [2, 6, 0], sizes = [1, 1, 128], strides = [1, 1, 1]} : vector<3x8x128xf32> to vector<1x1x128xf32>
    %273 = vector.shape_cast %272 : vector<1x1x128xf32> to vector<1x128xf32>
    %274 = vector.extract_strided_slice %260 {offsets = [6, 0], sizes = [3, 128], strides = [1, 1]} : vector<9x128xf32> to vector<3x128xf32>
    %275 = vector.broadcast %273 : vector<1x128xf32> to vector<3x128xf32>
    %276 = arith.mulf %275, %274 : vector<3x128xf32>
    %277 = arith.addf %271, %276 : vector<3x128xf32>
    %c0_i32_63 = arith.constant 0 : i32
    %278 = vector.broadcast %c0_i32_63 : i32 to vector<1x128xi32>
    %279 = arith.cmpi slt, %253, %278 : vector<1x128xi32>
    %280 = vector.shape_cast %279 : vector<1x128xi1> to vector<1x128xi1>
    %281 = vector.broadcast %280 : vector<1x128xi1> to vector<3x128xi1>
    %282 = vector.shape_cast %3 : vector<3x1xf32> to vector<3x1xf32>
    %283 = vector.broadcast %282 : vector<3x1xf32> to vector<3x128xf32>
    %284 = arith.select %281, %283, %277 : vector<3x128xi1>, vector<3x128xf32>
    %c0_64 = arith.constant 0 : index
    %c6 = arith.constant 6 : index
    %c0_65 = arith.constant 0 : index
    %285 = vector.load %arg5[%c0_64, %c6, %c0_65] : memref<4x8x128xf32, #tpu.memory_space<vmem>>, vector<3x1x128xf32>
    %286 = vector.shape_cast %285 : vector<3x1x128xf32> to vector<3x128xf32>
    %287 = vector.shape_cast %284 : vector<3x128xf32> to vector<3x1x128xf32>
    tpu.vector_store %arg5[%c0_64, %c6, %c0_65], %287 {strides = array<i32>} : memref<4x8x128xf32, #tpu.memory_space<vmem>>, vector<3x1x128xf32>,
    %cst_66 = arith.constant 0.000000e+00 : f32
    %cst_67 = arith.constant 5.000000e-01 : f32
    %288 = vector.broadcast %cst_66 : f32 to vector<1x128xf32>
    %289 = vector.broadcast %cst_67 : f32 to vector<1x128xf32>
    %290 = arith.select %279, %288, %289 : vector<1x128xi1>, vector<1x128xf32>
    %c3_68 = arith.constant 3 : index
    %c6_69 = arith.constant 6 : index
    %c0_70 = arith.constant 0 : index
    %291 = vector.load %arg5[%c3_68, %c6_69, %c0_70] : memref<4x8x128xf32, #tpu.memory_space<vmem>>, vector<1x1x128xf32>
    %292 = vector.shape_cast %291 : vector<1x1x128xf32> to vector<1x128xf32>
    %293 = vector.shape_cast %290 : vector<1x128xf32> to vector<1x1x128xf32>
    tpu.vector_store %arg5[%c3_68, %c6_69, %c0_70], %293 {strides = array<i32>} : memref<4x8x128xf32, #tpu.memory_space<vmem>>, vector<1x1x128xf32>,
    %294 = vector.extract_strided_slice %0 {offsets = [7, 0], sizes = [1, 128], strides = [1, 1]} : vector<8x128xi32> to vector<1x128xi32>
    %295 = vector.broadcast %6 : vector<8x1xi32> to vector<8x128xi32>
    %296 = vector.broadcast %294 : vector<1x128xi32> to vector<8x128xi32>
    %297 = arith.cmpi eq, %295, %296 : vector<8x128xi32>
    %298 = arith.extui %297 : vector<8x128xi1> to vector<8x128xi32>
    %299 = arith.sitofp %298 : vector<8x128xi32> to vector<8x128xf32>
    %300 = arith.truncf %299 : vector<8x128xf32> to vector<8x128xbf16>
    %cst_71 = arith.constant dense<0.000000e+00> : vector<9x128xf32>
    %301 = tpu.matmul %2, %300, %cst_71 {dimension_numbers = #tpu.dot_dimension_numbers<[1], [0], [0], [1], [0, 0, 1, 1], [], []>} : vector<9x8xbf16>, vector<8x128xbf16>, vector<9x128xf32> -> vector<9x128xf32>
    %302 = vector.extract_strided_slice %1 {offsets = [0, 7, 0], sizes = [1, 1, 128], strides = [1, 1, 1]} : vector<3x8x128xf32> to vector<1x1x128xf32>
    %303 = vector.shape_cast %302 : vector<1x1x128xf32> to vector<1x128xf32>
    %304 = vector.extract_strided_slice %301 {offsets = [0, 0], sizes = [3, 128], strides = [1, 1]} : vector<9x128xf32> to vector<3x128xf32>
    %305 = vector.broadcast %303 : vector<1x128xf32> to vector<3x128xf32>
    %306 = arith.mulf %305, %304 : vector<3x128xf32>
    %307 = vector.extract_strided_slice %1 {offsets = [1, 7, 0], sizes = [1, 1, 128], strides = [1, 1, 1]} : vector<3x8x128xf32> to vector<1x1x128xf32>
    %308 = vector.shape_cast %307 : vector<1x1x128xf32> to vector<1x128xf32>
    %309 = vector.extract_strided_slice %301 {offsets = [3, 0], sizes = [3, 128], strides = [1, 1]} : vector<9x128xf32> to vector<3x128xf32>
    %310 = vector.broadcast %308 : vector<1x128xf32> to vector<3x128xf32>
    %311 = arith.mulf %310, %309 : vector<3x128xf32>
    %312 = arith.addf %306, %311 : vector<3x128xf32>
    %313 = vector.extract_strided_slice %1 {offsets = [2, 7, 0], sizes = [1, 1, 128], strides = [1, 1, 1]} : vector<3x8x128xf32> to vector<1x1x128xf32>
    %314 = vector.shape_cast %313 : vector<1x1x128xf32> to vector<1x128xf32>
    %315 = vector.extract_strided_slice %301 {offsets = [6, 0], sizes = [3, 128], strides = [1, 1]} : vector<9x128xf32> to vector<3x128xf32>
    %316 = vector.broadcast %314 : vector<1x128xf32> to vector<3x128xf32>
    %317 = arith.mulf %316, %315 : vector<3x128xf32>
    %318 = arith.addf %312, %317 : vector<3x128xf32>
    %c0_i32_72 = arith.constant 0 : i32
    %319 = vector.broadcast %c0_i32_72 : i32 to vector<1x128xi32>
    %320 = arith.cmpi slt, %294, %319 : vector<1x128xi32>
    %321 = vector.shape_cast %320 : vector<1x128xi1> to vector<1x128xi1>
    %322 = vector.broadcast %321 : vector<1x128xi1> to vector<3x128xi1>
    %323 = vector.shape_cast %3 : vector<3x1xf32> to vector<3x1xf32>
    %324 = vector.broadcast %323 : vector<3x1xf32> to vector<3x128xf32>
    %325 = arith.select %322, %324, %318 : vector<3x128xi1>, vector<3x128xf32>
    %c0_73 = arith.constant 0 : index
    %c7 = arith.constant 7 : index
    %c0_74 = arith.constant 0 : index
    %326 = vector.load %arg5[%c0_73, %c7, %c0_74] : memref<4x8x128xf32, #tpu.memory_space<vmem>>, vector<3x1x128xf32>
    %327 = vector.shape_cast %326 : vector<3x1x128xf32> to vector<3x128xf32>
    %328 = vector.shape_cast %325 : vector<3x128xf32> to vector<3x1x128xf32>
    tpu.vector_store %arg5[%c0_73, %c7, %c0_74], %328 {strides = array<i32>} : memref<4x8x128xf32, #tpu.memory_space<vmem>>, vector<3x1x128xf32>,
    %cst_75 = arith.constant 0.000000e+00 : f32
    %cst_76 = arith.constant 5.000000e-01 : f32
    %329 = vector.broadcast %cst_75 : f32 to vector<1x128xf32>
    %330 = vector.broadcast %cst_76 : f32 to vector<1x128xf32>
    %331 = arith.select %320, %329, %330 : vector<1x128xi1>, vector<1x128xf32>
    %c3_77 = arith.constant 3 : index
    %c7_78 = arith.constant 7 : index
    %c0_79 = arith.constant 0 : index
    %332 = vector.load %arg5[%c3_77, %c7_78, %c0_79] : memref<4x8x128xf32, #tpu.memory_space<vmem>>, vector<1x1x128xf32>
    %333 = vector.shape_cast %332 : vector<1x1x128xf32> to vector<1x128xf32>
    %334 = vector.shape_cast %331 : vector<1x128xf32> to vector<1x1x128xf32>
    tpu.vector_store %arg5[%c3_77, %c7_78, %c0_79], %334 {strides = array<i32>} : memref<4x8x128xf32, #tpu.memory_space<vmem>>, vector<1x1x128xf32>,
    return
  }
  func.func @transform_0(%arg0: i32) -> (i32, i32) {
    %c0_i32 = arith.constant 0 : i32
    %c0_i32_0 = arith.constant 0 : i32
    return %c0_i32, %arg0 : i32, i32
  }
  func.func @transform_1(%arg0: i32) -> (i32, i32, i32) {
    %c0_i32 = arith.constant 0 : i32
    %c0_i32_0 = arith.constant 0 : i32
    %c0_i32_1 = arith.constant 0 : i32
    return %c0_i32, %c0_i32_0, %arg0 : i32, i32, i32
  }
  func.func @transform_2(%arg0: i32) -> (i32, i32) {
    %c0_i32 = arith.constant 0 : i32
    %c0_i32_0 = arith.constant 0 : i32
    %c0_i32_1 = arith.constant 0 : i32
    return %c0_i32, %c0_i32_0 : i32, i32
  }
  func.func @transform_3(%arg0: i32) -> (i32, i32) {
    %c0_i32 = arith.constant 0 : i32
    %c0_i32_0 = arith.constant 0 : i32
    %c0_i32_1 = arith.constant 0 : i32
    return %c0_i32, %c0_i32_0 : i32, i32
  }
  func.func @transform_4(%arg0: i32) -> (i32, i32, i32) {
    %c0_i32 = arith.constant 0 : i32
    %c0_i32_0 = arith.constant 0 : i32
    %c0_i32_1 = arith.constant 0 : i32
    return %c0_i32, %c0_i32_0, %arg0 : i32, i32, i32
  }
}

</mosaic_0001>

<llo_original>
// kernel: tpu_custom_call.1
$region0: #{tpu_custom_call.1}
  #allocation0 [shape = 'u32[]', space=smem, size = 0x4, offset = 0x4, fixed_abs, tag = 'smem constant byte address 0x4 - core index']
  #allocation1 [shape = 'u32[144,128]{1,0:T(1,128)}', space=vmem, size = 0x12000, scoped, tag = 'internal scratch']
  %s0 = inlined_call_operand.vmem [shape: s32[8,256], index: 0, kind: input, shape index: {}]
  %s1 = inlined_call_operand.hbm [shape: f32[3,8,256], index: 1, kind: input, shape index: {}]
  %s2 = inlined_call_operand.vmem [shape: bf16[9,8], index: 2, kind: input, shape index: {}]
  %s3 = inlined_call_operand.vmem [shape: f32[3,1], index: 3, kind: input, shape index: {}]
  %s4 = inlined_call_operand.hbm [shape: f32[4,8,256], index: 4, kind: output, shape index: {}]
  %s5 = sld [smem:[#allocation0]]
  $region53: #{tpu_custom_call.1} parent=0
    _
  %s7 = ssub.s32 1, %s5
  %s8 = scalar_select 0, %s7, %s5
  $region1: #{tpu_custom_call.1} parent=0
    #allocation2 [shape = 'u8[24576]{0}', space=vmem, size = 0x6000, scoped, tag = 'input window, operand 1']
    #allocation3 [shape = 's32[2]{0}', space=sflag, size = 0x8, scoped, tag = 'scoped memory for tpu_custom_call.1']
    #allocation4 [shape = 's32[2]{0}', space=sflag, size = 0x8, scoped, tag = 'scoped memory for tpu_custom_call.1']
    #allocation5 [shape = 'u8[32768]{0}', space=vmem, size = 0x8000, scoped, tag = 'output window, operand 0']
    %9 = vsyncpa [#allocation3], 0
    %s10 = scalar_lea.sflag [#allocation3], 1
    %11 = vsyncpa %s10, 0
    %12 = vsyncpa [#allocation4], 0
    %s13 = scalar_lea.sflag [#allocation4], 1
    %14 = vsyncpa %s13, 0
    loop: start=0, step=1, limit=4
    $region2: #{tpu_custom_call.1} parent=1 // loop_pre_header
      _
    $region3: #{tpu_custom_call.1} parent=1 // loop_header
      %s16 = sphi 0, %s20
      %p17 = scmp.ge.s32.totalorder %s16, 4
      %s26 = sphi 0, %s28
      %s29 = sphi 0, %s26
      %s30 = sphi 0, %s29
      %s46 = sphi 0, %s30
      %s52 = sphi 0, %s54
      %s55 = sphi 0, %s52
      %s56 = sphi 0, %s55
      %s72 = sphi 0, %s56
      %s76 = sphi 0, %s76
      %s78 = sphi 0, %s76
      %s79 = sphi 0, %s78
      %s93 = sphi 0, %s79
      %s97 = sphi 0, %s97
      %s99 = sphi 0, %s97
      %s100 = sphi 0, %s99
      %s114 = sphi 0, %s100
      %s120 = sphi 0, %s122
      %s123 = sphi 0, %s120
      %s124 = sphi 0, %s123
      %s140 = sphi 0, %s124
    $region4: #{tpu_custom_call.1} parent=1 // loop_header_branch
      %19 = sbr.rel (%p17) target = $region8
    $region5: #{tpu_custom_call.1} parent=1 // loop_body
      %s21 = ssub.s32 %s16, 1
      %s22 = ssub.s32 %s16, 2
      %s23 = sadd.s32 %s16, 1
      %s24 = ssub.s32 %s16, %s23
      %p25 = scmp.eq.s32.totalorder %s24, 0
      %s27 = sadd.s32 %s26, 1
      %s28 = scalar_select %p25, %s26, %s27
      %p31 = pneg %p25
      %p32 = scmp.eq.s32.totalorder %s16, 1
      %p33 = por %p31, %p32
      %p34 = scmp.ne.s32.totalorder %s26, %s29
      %p35 = scmp.eq.s32.totalorder %s16, 0
      %p36 = por %p34, %p35
      %p37 = scmp.ne.s32.totalorder %s26, %s29
      %p38 = scmp.eq.s32.totalorder %s21, 1
      %p39 = por %p37, %p38
      %p40 = scmp.ne.s32.totalorder %s29, %s30
      %p41 = scmp.eq.s32.totalorder %s21, 0
      %p42 = por %p40, %p41
      %p43 = scmp.ne.s32.totalorder %s29, %s30
      %p44 = scmp.eq.s32.totalorder %s22, 1
      %p45 = por %p43, %p44
      %p47 = scmp.ne.s32.totalorder %s30, %s46
      %p48 = scmp.eq.s32.totalorder %s22, 0
      %p49 = por %p47, %p48
      %s50 = ssub.s32 %s16, %s23
      %p51 = scmp.eq.s32.totalorder %s50, 0
      %s53 = sadd.s32 %s52, 1
      %s54 = scalar_select %p51, %s52, %s53
      %p57 = pneg %p51
      %p58 = scmp.eq.s32.totalorder %s16, 1
      %p59 = por %p57, %p58
      %p60 = scmp.ne.s32.totalorder %s52, %s55
      %p61 = scmp.eq.s32.totalorder %s16, 0
      %p62 = por %p60, %p61
      %p63 = scmp.ne.s32.totalorder %s52, %s55
      %p64 = scmp.eq.s32.totalorder %s21, 1
      %p65 = por %p63, %p64
      %p66 = scmp.ne.s32.totalorder %s55, %s56
      %p67 = scmp.eq.s32.totalorder %s21, 0
      %p68 = por %p66, %p67
      %p69 = scmp.ne.s32.totalorder %s55, %s56
      %p70 = scmp.eq.s32.totalorder %s22, 1
      %p71 = por %p69, %p70
      %p73 = scmp.ne.s32.totalorder %s56, %s72
      %p74 = scmp.eq.s32.totalorder %s22, 0
      %p75 = por %p73, %p74
      %s77 = sadd.s32 %s76, 1
      %p80 = scmp.eq.s32.totalorder %s16, 1
      %p81 = scmp.ne.s32.totalorder %s76, %s78
      %p82 = scmp.eq.s32.totalorder %s16, 0
      %p83 = por %p81, %p82
      %p84 = scmp.ne.s32.totalorder %s76, %s78
      %p85 = scmp.eq.s32.totalorder %s21, 1
      %p86 = por %p84, %p85
      %p87 = scmp.ne.s32.totalorder %s78, %s79
      %p88 = scmp.eq.s32.totalorder %s21, 0
      %p89 = por %p87, %p88
      %p90 = scmp.ne.s32.totalorder %s78, %s79
      %p91 = scmp.eq.s32.totalorder %s22, 1
      %p92 = por %p90, %p91
      %p94 = scmp.ne.s32.totalorder %s79, %s93
      %p95 = scmp.eq.s32.totalorder %s22, 0
      %p96 = por %p94, %p95
      %s98 = sadd.s32 %s97, 1
      %p101 = scmp.eq.s32.totalorder %s16, 1
      %p102 = scmp.ne.s32.totalorder %s97, %s99
      %p103 = scmp.eq.s32.totalorder %s16, 0
      %p104 = por %p102, %p103
      %p105 = scmp.ne.s32.totalorder %s97, %s99
      %p106 = scmp.eq.s32.totalorder %s21, 1
      %p107 = por %p105, %p106
      %p108 = scmp.ne.s32.totalorder %s99, %s100
      %p109 = scmp.eq.s32.totalorder %s21, 0
      %p110 = por %p108, %p109
      %p111 = scmp.ne.s32.totalorder %s99, %s100
      %p112 = scmp.eq.s32.totalorder %s22, 1
      %p113 = por %p111, %p112
      %p115 = scmp.ne.s32.totalorder %s100, %s114
      %p116 = scmp.eq.s32.totalorder %s22, 0
      %p117 = por %p115, %p116
      %s118 = ssub.s32 %s16, %s23
      %p119 = scmp.eq.s32.totalorder %s118, 0
      %s121 = sadd.s32 %s120, 1
      %s122 = scalar_select %p119, %s120, %s121
      %p125 = pneg %p119
      %p126 = scmp.eq.s32.totalorder %s16, 1
      %p127 = por %p125, %p126
      %p128 = scmp.ne.s32.totalorder %s120, %s123
      %p129 = scmp.eq.s32.totalorder %s16, 0
      %p130 = por %p128, %p129
      %p131 = scmp.ne.s32.totalorder %s120, %s123
      %p132 = scmp.eq.s32.totalorder %s21, 1
      %p133 = por %p131, %p132
      %p134 = scmp.ne.s32.totalorder %s123, %s124
      %p135 = scmp.eq.s32.totalorder %s21, 0
      %p136 = por %p134, %p135
      %p137 = scmp.ne.s32.totalorder %s123, %s124
      %p138 = scmp.eq.s32.totalorder %s22, 1
      %p139 = por %p137, %p138
      %p141 = scmp.ne.s32.totalorder %s124, %s140
      %p142 = scmp.eq.s32.totalorder %s22, 0
      %p143 = por %p141, %p142
      %p144 = scmp.le.s32.totalorder 1, %s16
      %p145 = scmp.lt.s32.totalorder %s16, 3
      %p146 = pnand %p144, %p145
      %p147 = pneg %p146
      // Predicated region
      $region9: #{tpu_custom_call.1} parent=5 // pred_check
        _
      $region10: #{tpu_custom_call.1} parent=5 // pred_check_branch
        %149 = sbr.rel (%p146) target = $region12
      $region11: #{tpu_custom_call.1} parent=5 // pred_region
        %s150 = ssub.s32 %s16, 1
        // Predicated region
        $region13: #{tpu_custom_call.1} parent=11 // pred_check
          %p151 = pneg %p89
        $region14: #{tpu_custom_call.1} parent=11 // pred_check_branch
          %153 = sbr.rel (%p151) target = $region16
        $region15: #{tpu_custom_call.1} parent=11 // pred_region
          _
        $region16: #{tpu_custom_call.1} parent=11 // pred_fallthru
          _
        // Predicated region
        $region17: #{tpu_custom_call.1} parent=11 // pred_check
          %p154 = pneg %p110
        $region18: #{tpu_custom_call.1} parent=11 // pred_check_branch
          %156 = sbr.rel (%p154) target = $region20
        $region19: #{tpu_custom_call.1} parent=11 // pred_region
          _
        $region20: #{tpu_custom_call.1} parent=11 // pred_fallthru
          _
      $region12: #{tpu_custom_call.1} parent=5 // pred_fallthru
        _
      %p157 = scmp.lt.s32.totalorder %s16, 2
      // Predicated region
      $region21: #{tpu_custom_call.1} parent=5 // pred_check
        %p158 = pneg %p157
      $region22: #{tpu_custom_call.1} parent=5 // pred_check_branch
        %160 = sbr.rel (%p158) target = $region24
      $region23: #{tpu_custom_call.1} parent=5 // pred_region
        // Predicated region
        $region25: #{tpu_custom_call.1} parent=23 // pred_check
          %p161 = pneg %p36
        $region26: #{tpu_custom_call.1} parent=23 // pred_check_branch
          %163 = sbr.rel (%p161) target = $region28
        $region27: #{tpu_custom_call.1} parent=23 // pred_region
          %p164 = scmp.lt.s32.totalorder %s16, 1
          %s165 = scalar_select %p164, %s16, 1
          %s166 = smul.addr %s165, 8
          %s167 = scalar_lea.vmem %s0, %s166
        $region28: #{tpu_custom_call.1} parent=23 // pred_fallthru
          _
        // Predicated region
        $region29: #{tpu_custom_call.1} parent=23 // pred_check
          %p168 = pneg %p62
        $region30: #{tpu_custom_call.1} parent=23 // pred_check_branch
          %170 = sbr.rel (%p168) target = $region32
        $region31: #{tpu_custom_call.1} parent=23 // pred_region
          %s171 = sand.u32 %s52, 1
          %s172 = scalar_lea.sflag [#allocation3], %s171
          %s173 = sand.u32 %s52, 1
          %s174 = smul.addr %s173, 24
          %s175 = scalar_lea.vmem [#allocation2], %s174
          %s177 = ssub.s32 384, 384
          %178 = vsyncadd %s172, %s177
          %s179 = smul.addr %s16, 128
          %s180 = scalar_lea.hbm %s1, %s179
          %s181 = sshll.u32 %s175, 4
          %s182 = int_to_ptr.vmem [resolvable:$true] %s181
          %187 = dma.hbm_to_vmem [thread:$0]  %s180, 384, %s182, %s172, 256, 128, 8
        $region32: #{tpu_custom_call.1} parent=23 // pred_fallthru
          _
      $region24: #{tpu_custom_call.1} parent=5 // pred_fallthru
        _
      %p188 = scmp.le.s32.totalorder 1, %s16
      %p189 = scmp.lt.s32.totalorder %s16, 3
      %p190 = pnand %p188, %p189
      %p191 = pneg %p190
      // Predicated region
      $region33: #{tpu_custom_call.1} parent=5 // pred_check
        _
      $region34: #{tpu_custom_call.1} parent=5 // pred_check_branch
        %193 = sbr.rel (%p190) target = $region36
      $region35: #{tpu_custom_call.1} parent=5 // pred_region
        %s194 = ssub.s32 %s16, 1
        %s195 = sand.u32 %s55, 1
        %s196 = scalar_lea.sflag [#allocation3], %s195
        %s197 = sand.u32 %s55, 1
        %s198 = smul.addr %s197, 24
        %s199 = scalar_lea.vmem [#allocation2], %s198
        // Predicated region
        $region37: #{tpu_custom_call.1} parent=35 // pred_check
          %p200 = pneg %p68
        $region38: #{tpu_custom_call.1} parent=35 // pred_check_branch
          %202 = sbr.rel (%p200) target = $region40
        $region39: #{tpu_custom_call.1} parent=35 // pred_region
          %203 = dma.done %s196, 384
        $region40: #{tpu_custom_call.1} parent=35 // pred_fallthru
          _
        %p204 = scmp.lt.s32.totalorder %s21, 1
        %s205 = scalar_select %p204, %s21, 1
        %s206 = smul.addr %s205, 8
        %s207 = scalar_lea.vmem %s0, %s206
        %p208 = pneg %p42
        %p209 = pneg %p39
        %s210 = sand.u32 %s55, 1
        %s211 = scalar_lea.sflag [#allocation3], %s210
        %s212 = sand.u32 %s55, 1
        %s213 = smul.addr %s212, 24
        %s214 = scalar_lea.vmem [#allocation2], %s213
        %p215 = pneg %p68
        %p216 = pneg %p65
        %p217 = pneg %p89
        %p218 = pneg %p86
        %p219 = pneg %p110
        %p220 = pneg %p107
        %p221 = pneg %p136
        %p222 = pneg %p133
        %s223 = sand.u32 %s123, 1
        %s224 = scalar_lea.sflag [#allocation4], %s223
        %s225 = sand.u32 %s123, 1
        %s226 = smul.addr %s225, 32
        %s227 = scalar_lea.vmem [#allocation5], %s226
        %p228 = scmp.lt.s32.totalorder %s21, 1
        %s229 = scalar_select %p228, %s21, 1
        %s230 = smul.addr %s229, 8
        %s231 = scalar_lea.vmem %s0, %s230
        %v233 = vld [vmem:[%s231] sm:$0xff]
        %v234 = vld [vmem:[%s199] sm:$0xff]
        %v235 = vld [vmem:[%s199 + $0x8] sm:$0xff]
        %v236 = vld [vmem:[%s199 + $0x10] sm:$0xff]
        %v237 = vld [vmem:[%s2] sm:$0xf]
        %v238 = vld [vmem:[%s2 + $0x4] sm:$0x1]
        %v239 = vld [vmem:[%s3] sm:$0x7]
        %v240 = vlaneseq
        %v241 = vshrl.u32 %v240, 7
        %v242 = vlaneseq
        %v243 = vshrl.u32 %v242, 7
        %v244 = vsub.s32 0, %v243
        %v245 = vrot.slane %v233, %v244
        %vm246 = vcmp.eq.s32.totalorder %v241, %v245
        %v247 = vsel %vm246, 1, 0
        %v248 = vcvt.s32.f32 %v247
        %v249 = vpack.c.bf16 %v248, %v248
        %v252 = vunpack.c.l.b16 %v237
        %v253 = vunpack.c.l.b16 %v238
        %v254 = vpack.c.b16 %v253, %v252
        %vm255 = vcmask 64512
        %v257 = vsel %vm255, %v254, 0
        %vm259 = vcmask 1043456
        %v261 = vsel %vm259, %v249, 0
        %263 = vmatprep.subr.bf16.mxu0 0
        %264 = vmatpush1.bf16.msra.mxu0 0
        %265 = vmatprep.subr.bf16.mxu0 0
        %266 = vmatpush1.bf16.msra.mxu0 0
        %267 = vmatprep.subr.bf16.mxu0 0
        %268 = vmatpush1.bf16.msra.mxu0 0
        %269 = vmatprep.subr.bf16.mxu0 0
        %270 = vmatpush1.bf16.msra.mxu0 0
        %271 = vmatprep.subr.bf16.mxu0 0
        %272 = vmatpush1.bf16.msra.mxu0 0
        %273 = vmatprep.subr.bf16.mxu0 0
        %274 = vmatpush1.bf16.msra.mxu0 0
        %275 = vmatprep.subr.bf16.mxu0 0
        %276 = vmatpush1.bf16.msra.mxu0 0
        %277 = vmatprep.subr.bf16.mxu0 0
        %278 = vmatpush1.bf16.msra.mxu0 %v261
        %279 = vmatprep.subr.bf16.mxu0 0
        %280 = vmatpush2.bf16.msra.mxu0 0
        %281 = vmatprep.subr.bf16.mxu0 0
        %282 = vmatpush2.bf16.msra.mxu0 0
        %283 = vmatprep.subr.bf16.mxu0 0
        %284 = vmatpush2.bf16.msra.mxu0 0
        %285 = vmatprep.subr.bf16.mxu0 0
        %286 = vmatpush2.bf16.msra.mxu0 0
        %287 = vmatprep.subr.bf16.mxu0 0
        %288 = vmatpush2.bf16.msra.mxu0 0
        %289 = vmatprep.subr.bf16.mxu0 0
        %290 = vmatpush2.bf16.msra.mxu0 0
        %291 = vmatprep.subr.bf16.mxu0 0
        %292 = vmatpush2.bf16.msra.mxu0 0
        %293 = vmatprep.subr.bf16.mxu0 0
        %294 = vmatpush2.bf16.msra.mxu0 0
        %295 = vmatprep.mubr.bf16.mxu0 0
        %296 = vmatmul.mubr.bf16.gmra.mxu0 %v257
        %v297 = vpop.f32.mrf.mxu0
        %v298 = vadd.f32 0.0, %v297
        %v299 = vpop.f32.mrf.mxu0
        %v300 = vpop.f32.mrf.mxu0
        %v301 = vadd.f32 0.0, %v300
        %v302 = vpop.f32.mrf.mxu0
        %303 = vdwg.mxu0
        %v304 = vlaneseq
        %v305 = vshrl.u32 %v304, 7
        %v306 = vsub.s32 0, %v305
        %v307 = vrot.slane %v234, %v306
        %v308 = vmul.f32 %v307, %v298
        %v309 = vlaneseq
        %v310 = vshrl.u32 %v309, 7
        %v311 = vsub.s32 0, %v310
        %v312 = vrot.slane %v235, %v311
        %v313 = vmul.f32 %v312, %v298
        %v315 = vrot.slane %v313, 3
        %v317 = vadd.f32 %v308, %v315
        %v318 = vlaneseq
        %v319 = vshrl.u32 %v318, 7
        %v320 = vsub.s32 0, %v319
        %v321 = vrot.slane %v236, %v320
        %v322 = vmul.f32 %v321, %v298
        %v323 = vmul.f32 %v321, %v301
        %vm326 = vcmask 1041408
        %v327 = vrot.slane %v322, 6
        %v328 = vrot.slane %v323, 6
        %v329 = vsel %vm326, %v327, %v328
        %v331 = vadd.f32 %v317, %v329
        %vm332 = vcmp.lt.s32.totalorder %v233, 0
        %v333 = vsel %vm332, 1, 0
        %v334 = vlaneseq
        %v335 = vshrl.u32 %v334, 7
        %v336 = vsub.s32 0, %v335
        %v337 = vrot.slane %v333, %v336
        %vm338 = vcmp.eq.s32.totalorder %v337, 1
        %340 = vset.pattern.permute.xlu0 0
        %341 = vperm.xlu0 %340, %v239
        %v342 = vpop.permute.xlu0 %341
        %v344 = vsel %vm338, %v342, %v331
        %v347 = vunpack.c.l.s4 1966171168
        %v348 = vunpack.c.0.s8 %v347
        %v349 = vlaneseq
        %v350 = vshrl.u32 %v349, 7
        %v351 = vsub.s32 %v348, %v350
        %v352 = vrot.slane %v344, %v351
        %v353 = vcombine.high %v352, %v352
        %v355 = vunpack.c.l.s4 1966171168
        %v356 = vunpack.c.0.s8 %v355
        %v357 = vlaneseq
        %v358 = vshrl.u32 %v357, 7
        %v359 = vsub.s32 %v356, %v358
        %v360 = vrot.slane %v352, %v359
        %v362 = vunpack.c.l.s4 1966171168
        %v363 = vunpack.c.0.s8 %v362
        %v364 = vlaneseq
        %v365 = vshrl.u32 %v364, 7
        %v366 = vsub.s32 %v363, %v365
        %v367 = vrot.slane %v353, %v366
        %v368 = vcombine.high %v360, %v360
        %372 = vst [vmem:[%s227] sm:$0x1] %v360
        %373 = vst [vmem:[%s227 + $0x8] sm:$0x1] %v367
        %374 = vst [vmem:[%s227 + $0x10] sm:$0x1] %v368
        %v375 = vsel %vm332, 0.0, 0.5
        %s376 = scalar_lea.vmem %s227, 24 [#allocation5]
        %377 = vst [vmem:[%s376] sm:$0x1] %v375
        %v378 = vlaneseq
        %v379 = vshrl.u32 %v378, 7
        %v380 = vsub.s32 1, %v379
        %v381 = vrot.slane %v233, %v380
        %vm382 = vcmp.eq.s32.totalorder %v241, %v381
        %v383 = vsel %vm382, 1, 0
        %v384 = vcvt.s32.f32 %v383
        %v385 = vpack.c.bf16 %v384, %v384
        %v387 = vsel %vm259, %v385, 0
        %389 = vmatprep.subr.bf16.mxu0 0
        %390 = vmatpush1.bf16.msra.mxu0 0
        %391 = vmatprep.subr.bf16.mxu0 0
        %392 = vmatpush1.bf16.msra.mxu0 0
        %393 = vmatprep.subr.bf16.mxu0 0
        %394 = vmatpush1.bf16.msra.mxu0 0
        %395 = vmatprep.subr.bf16.mxu0 0
        %396 = vmatpush1.bf16.msra.mxu0 0
        %397 = vmatprep.subr.bf16.mxu0 0
        %398 = vmatpush1.bf16.msra.mxu0 0
        %399 = vmatprep.subr.bf16.mxu0 0
        %400 = vmatpush1.bf16.msra.mxu0 0
        %401 = vmatprep.subr.bf16.mxu0 0
        %402 = vmatpush1.bf16.msra.mxu0 0
        %403 = vmatprep.subr.bf16.mxu0 0
        %404 = vmatpush1.bf16.msra.mxu0 %v387
        %405 = vmatprep.subr.bf16.mxu0 0
        %406 = vmatpush2.bf16.msra.mxu0 0
        %407 = vmatprep.subr.bf16.mxu0 0
        %408 = vmatpush2.bf16.msra.mxu0 0
        %409 = vmatprep.subr.bf16.mxu0 0
        %410 = vmatpush2.bf16.msra.mxu0 0
        %411 = vmatprep.subr.bf16.mxu0 0
        %412 = vmatpush2.bf16.msra.mxu0 0
        %413 = vmatprep.subr.bf16.mxu0 0
        %414 = vmatpush2.bf16.msra.mxu0 0
        %415 = vmatprep.subr.bf16.mxu0 0
        %416 = vmatpush2.bf16.msra.mxu0 0
        %417 = vmatprep.subr.bf16.mxu0 0
        %418 = vmatpush2.bf16.msra.mxu0 0
        %419 = vmatprep.subr.bf16.mxu0 0
        %420 = vmatpush2.bf16.msra.mxu0 0
        %421 = vmatprep.mubr.bf16.mxu0 0
        %422 = vmatmul.mubr.bf16.gmra.mxu0 %v257
        %v423 = vpop.f32.mrf.mxu0
        %v424 = vadd.f32 0.0, %v423
        %v425 = vpop.f32.mrf.mxu0
        %v426 = vpop.f32.mrf.mxu0
        %v427 = vadd.f32 0.0, %v426
        %v428 = vpop.f32.mrf.mxu0
        %429 = vdwg.mxu0
        %v430 = vlaneseq
        %v431 = vshrl.u32 %v430, 7
        %v432 = vsub.s32 1, %v431
        %v433 = vrot.slane %v234, %v432
        %v434 = vmul.f32 %v433, %v424
        %v435 = vlaneseq
        %v436 = vshrl.u32 %v435, 7
        %v437 = vsub.s32 1, %v436
        %v438 = vrot.slane %v235, %v437
        %v439 = vmul.f32 %v438, %v424
        %v441 = vrot.slane %v439, 3
        %v443 = vadd.f32 %v434, %v441
        %v444 = vlaneseq
        %v445 = vshrl.u32 %v444, 7
        %v446 = vsub.s32 1, %v445
        %v447 = vrot.slane %v236, %v446
        %v448 = vmul.f32 %v447, %v424
        %v449 = vmul.f32 %v447, %v427
        %v452 = vrot.slane %v448, 6
        %v453 = vrot.slane %v449, 6
        %v454 = vsel %vm326, %v452, %v453
        %v456 = vadd.f32 %v443, %v454
        %v457 = vlaneseq
        %v458 = vshrl.u32 %v457, 7
        %v459 = vsub.s32 1, %v458
        %v460 = vrot.slane %v333, %v459
        %vm461 = vcmp.eq.s32.totalorder %v460, 1
        %v462 = vsel %vm461, %v342, %v456
        %v465 = vunpack.c.l.s4 1966171168
        %v466 = vunpack.c.0.s8 %v465
        %v467 = vlaneseq
        %v468 = vshrl.u32 %v467, 7
        %v469 = vsub.s32 %v466, %v468
        %v470 = vrot.slane %v462, %v469
        %v471 = vcombine.high %v470, %v470
        %v473 = vunpack.c.l.s4 1966171168
        %v474 = vunpack.c.0.s8 %v473
        %v475 = vlaneseq
        %v476 = vshrl.u32 %v475, 7
        %v477 = vsub.s32 %v474, %v476
        %v478 = vrot.slane %v470, %v477
        %v480 = vunpack.c.l.s4 1966171168
        %v481 = vunpack.c.0.s8 %v480
        %v482 = vlaneseq
        %v483 = vshrl.u32 %v482, 7
        %v484 = vsub.s32 %v481, %v483
        %v485 = vrot.slane %v471, %v484
        %v486 = vcombine.high %v478, %v478
        %490 = vst [vmem:[%s227 + $0x1] sm:$0x1] %v478
        %491 = vst [vmem:[%s227 + $0x9] sm:$0x1] %v485
        %492 = vst [vmem:[%s227 + $0x11] sm:$0x1] %v486
        %493 = vst [vmem:[%s376] sm:$0x2] %v375
        %v494 = vlaneseq
        %v495 = vshrl.u32 %v494, 7
        %v496 = vsub.s32 2, %v495
        %v497 = vrot.slane %v233, %v496
        %vm498 = vcmp.eq.s32.totalorder %v241, %v497
        %v499 = vsel %vm498, 1, 0
        %v500 = vcvt.s32.f32 %v499
        %v501 = vpack.c.bf16 %v500, %v500
        %v503 = vsel %vm259, %v501, 0
        %505 = vmatprep.subr.bf16.mxu0 0
        %506 = vmatpush1.bf16.msra.mxu0 0
        %507 = vmatprep.subr.bf16.mxu0 0
        %508 = vmatpush1.bf16.msra.mxu0 0
        %509 = vmatprep.subr.bf16.mxu0 0
        %510 = vmatpush1.bf16.msra.mxu0 0
        %511 = vmatprep.subr.bf16.mxu0 0
        %512 = vmatpush1.bf16.msra.mxu0 0
        %513 = vmatprep.subr.bf16.mxu0 0
        %514 = vmatpush1.bf16.msra.mxu0 0
        %515 = vmatprep.subr.bf16.mxu0 0
        %516 = vmatpush1.bf16.msra.mxu0 0
        %517 = vmatprep.subr.bf16.mxu0 0
        %518 = vmatpush1.bf16.msra.mxu0 0
        %519 = vmatprep.subr.bf16.mxu0 0
        %520 = vmatpush1.bf16.msra.mxu0 %v503
        %521 = vmatprep.subr.bf16.mxu0 0
        %522 = vmatpush2.bf16.msra.mxu0 0
        %523 = vmatprep.subr.bf16.mxu0 0
        %524 = vmatpush2.bf16.msra.mxu0 0
        %525 = vmatprep.subr.bf16.mxu0 0
        %526 = vmatpush2.bf16.msra.mxu0 0
        %527 = vmatprep.subr.bf16.mxu0 0
        %528 = vmatpush2.bf16.msra.mxu0 0
        %529 = vmatprep.subr.bf16.mxu0 0
        %530 = vmatpush2.bf16.msra.mxu0 0
        %531 = vmatprep.subr.bf16.mxu0 0
        %532 = vmatpush2.bf16.msra.mxu0 0
        %533 = vmatprep.subr.bf16.mxu0 0
        %534 = vmatpush2.bf16.msra.mxu0 0
        %535 = vmatprep.subr.bf16.mxu0 0
        %536 = vmatpush2.bf16.msra.mxu0 0
        %537 = vmatprep.mubr.bf16.mxu0 0
        %538 = vmatmul.mubr.bf16.gmra.mxu0 %v257
        %v539 = vpop.f32.mrf.mxu0
        %v540 = vadd.f32 0.0, %v539
        %v541 = vpop.f32.mrf.mxu0
        %v542 = vpop.f32.mrf.mxu0
        %v543 = vadd.f32 0.0, %v542
        %v544 = vpop.f32.mrf.mxu0
        %545 = vdwg.mxu0
        %v546 = vlaneseq
        %v547 = vshrl.u32 %v546, 7
        %v548 = vsub.s32 2, %v547
        %v549 = vrot.slane %v234, %v548
        %v550 = vmul.f32 %v549, %v540
        %v551 = vlaneseq
        %v552 = vshrl.u32 %v551, 7
        %v553 = vsub.s32 2, %v552
        %v554 = vrot.slane %v235, %v553
        %v555 = vmul.f32 %v554, %v540
        %v557 = vrot.slane %v555, 3
        %v559 = vadd.f32 %v550, %v557
        %v560 = vlaneseq
        %v561 = vshrl.u32 %v560, 7
        %v562 = vsub.s32 2, %v561
        %v563 = vrot.slane %v236, %v562
        %v564 = vmul.f32 %v563, %v540
        %v565 = vmul.f32 %v563, %v543
        %v568 = vrot.slane %v564, 6
        %v569 = vrot.slane %v565, 6
        %v570 = vsel %vm326, %v568, %v569
        %v572 = vadd.f32 %v559, %v570
        %v573 = vlaneseq
        %v574 = vshrl.u32 %v573, 7
        %v575 = vsub.s32 2, %v574
        %v576 = vrot.slane %v333, %v575
        %vm577 = vcmp.eq.s32.totalorder %v576, 1
        %v578 = vsel %vm577, %v342, %v572
        %v581 = vunpack.c.l.s4 1966171168
        %v582 = vunpack.c.0.s8 %v581
        %v583 = vlaneseq
        %v584 = vshrl.u32 %v583, 7
        %v585 = vsub.s32 %v582, %v584
        %v586 = vrot.slane %v578, %v585
        %v587 = vcombine.high %v586, %v586
        %v589 = vunpack.c.l.s4 1966171168
        %v590 = vunpack.c.0.s8 %v589
        %v591 = vlaneseq
        %v592 = vshrl.u32 %v591, 7
        %v593 = vsub.s32 %v590, %v592
        %v594 = vrot.slane %v586, %v593
        %v596 = vunpack.c.l.s4 1966171168
        %v597 = vunpack.c.0.s8 %v596
        %v598 = vlaneseq
        %v599 = vshrl.u32 %v598, 7
        %v600 = vsub.s32 %v597, %v599
        %v601 = vrot.slane %v587, %v600
        %v602 = vcombine.high %v594, %v594
        %606 = vst [vmem:[%s227 + $0x2] sm:$0x1] %v594
        %607 = vst [vmem:[%s227 + $0xa] sm:$0x1] %v601
        %608 = vst [vmem:[%s227 + $0x12] sm:$0x1] %v602
        %609 = vst [vmem:[%s376] sm:$0x4] %v375
        %v610 = vlaneseq
        %v611 = vshrl.u32 %v610, 7
        %v612 = vsub.s32 3, %v611
        %v613 = vrot.slane %v233, %v612
        %vm614 = vcmp.eq.s32.totalorder %v241, %v613
        %v615 = vsel %vm614, 1, 0
        %v616 = vcvt.s32.f32 %v615
        %v617 = vpack.c.bf16 %v616, %v616
        %v619 = vsel %vm259, %v617, 0
        %621 = vmatprep.subr.bf16.mxu0 0
        %622 = vmatpush1.bf16.msra.mxu0 0
        %623 = vmatprep.subr.bf16.mxu0 0
        %624 = vmatpush1.bf16.msra.mxu0 0
        %625 = vmatprep.subr.bf16.mxu0 0
        %626 = vmatpush1.bf16.msra.mxu0 0
        %627 = vmatprep.subr.bf16.mxu0 0
        %628 = vmatpush1.bf16.msra.mxu0 0
        %629 = vmatprep.subr.bf16.mxu0 0
        %630 = vmatpush1.bf16.msra.mxu0 0
        %631 = vmatprep.subr.bf16.mxu0 0
        %632 = vmatpush1.bf16.msra.mxu0 0
        %633 = vmatprep.subr.bf16.mxu0 0
        %634 = vmatpush1.bf16.msra.mxu0 0
        %635 = vmatprep.subr.bf16.mxu0 0
        %636 = vmatpush1.bf16.msra.mxu0 %v619
        %637 = vmatprep.subr.bf16.mxu0 0
        %638 = vmatpush2.bf16.msra.mxu0 0
        %639 = vmatprep.subr.bf16.mxu0 0
        %640 = vmatpush2.bf16.msra.mxu0 0
        %641 = vmatprep.subr.bf16.mxu0 0
        %642 = vmatpush2.bf16.msra.mxu0 0
        %643 = vmatprep.subr.bf16.mxu0 0
        %644 = vmatpush2.bf16.msra.mxu0 0
        %645 = vmatprep.subr.bf16.mxu0 0
        %646 = vmatpush2.bf16.msra.mxu0 0
        %647 = vmatprep.subr.bf16.mxu0 0
        %648 = vmatpush2.bf16.msra.mxu0 0
        %649 = vmatprep.subr.bf16.mxu0 0
        %650 = vmatpush2.bf16.msra.mxu0 0
        %651 = vmatprep.subr.bf16.mxu0 0
        %652 = vmatpush2.bf16.msra.mxu0 0
        %653 = vmatprep.mubr.bf16.mxu0 0
        %654 = vmatmul.mubr.bf16.gmra.mxu0 %v257
        %v655 = vpop.f32.mrf.mxu0
        %v656 = vadd.f32 0.0, %v655
        %v657 = vpop.f32.mrf.mxu0
        %v658 = vpop.f32.mrf.mxu0
        %v659 = vadd.f32 0.0, %v658
        %v660 = vpop.f32.mrf.mxu0
        %661 = vdwg.mxu0
        %v662 = vlaneseq
        %v663 = vshrl.u32 %v662, 7
        %v664 = vsub.s32 3, %v663
        %v665 = vrot.slane %v234, %v664
        %v666 = vmul.f32 %v665, %v656
        %v667 = vlaneseq
        %v668 = vshrl.u32 %v667, 7
        %v669 = vsub.s32 3, %v668
        %v670 = vrot.slane %v235, %v669
        %v671 = vmul.f32 %v670, %v656
        %v673 = vrot.slane %v671, 3
        %v675 = vadd.f32 %v666, %v673
        %v676 = vlaneseq
        %v677 = vshrl.u32 %v676, 7
        %v678 = vsub.s32 3, %v677
        %v679 = vrot.slane %v236, %v678
        %v680 = vmul.f32 %v679, %v656
        %v681 = vmul.f32 %v679, %v659
        %v684 = vrot.slane %v680, 6
        %v685 = vrot.slane %v681, 6
        %v686 = vsel %vm326, %v684, %v685
        %v688 = vadd.f32 %v675, %v686
        %v689 = vlaneseq
        %v690 = vshrl.u32 %v689, 7
        %v691 = vsub.s32 3, %v690
        %v692 = vrot.slane %v333, %v691
        %vm693 = vcmp.eq.s32.totalorder %v692, 1
        %v694 = vsel %vm693, %v342, %v688
        %v697 = vunpack.c.l.s4 1966171168
        %v698 = vunpack.c.0.s8 %v697
        %v699 = vlaneseq
        %v700 = vshrl.u32 %v699, 7
        %v701 = vsub.s32 %v698, %v700
        %v702 = vrot.slane %v694, %v701
        %v703 = vcombine.high %v702, %v702
        %v705 = vunpack.c.l.s4 1966171168
        %v706 = vunpack.c.0.s8 %v705
        %v707 = vlaneseq
        %v708 = vshrl.u32 %v707, 7
        %v709 = vsub.s32 %v706, %v708
        %v710 = vrot.slane %v702, %v709
        %v712 = vunpack.c.l.s4 1966171168
        %v713 = vunpack.c.0.s8 %v712
        %v714 = vlaneseq
        %v715 = vshrl.u32 %v714, 7
        %v716 = vsub.s32 %v713, %v715
        %v717 = vrot.slane %v703, %v716
        %v718 = vcombine.high %v710, %v710
        %722 = vst [vmem:[%s227 + $0x3] sm:$0x1] %v710
        %723 = vst [vmem:[%s227 + $0xb] sm:$0x1] %v717
        %724 = vst [vmem:[%s227 + $0x13] sm:$0x1] %v718
        %725 = vst [vmem:[%s376] sm:$0x8] %v375
        %v726 = vlaneseq
        %v727 = vshrl.u32 %v726, 7
        %v728 = vsub.s32 4, %v727
        %v729 = vrot.slane %v233, %v728
        %vm730 = vcmp.eq.s32.totalorder %v241, %v729
        %v731 = vsel %vm730, 1, 0
        %v732 = vcvt.s32.f32 %v731
        %v733 = vpack.c.bf16 %v732, %v732
        %v735 = vsel %vm259, %v733, 0
        %737 = vmatprep.subr.bf16.mxu0 0
        %738 = vmatpush1.bf16.msra.mxu0 0
        %739 = vmatprep.subr.bf16.mxu0 0
        %740 = vmatpush1.bf16.msra.mxu0 0
        %741 = vmatprep.subr.bf16.mxu0 0
        %742 = vmatpush1.bf16.msra.mxu0 0
        %743 = vmatprep.subr.bf16.mxu0 0
        %744 = vmatpush1.bf16.msra.mxu0 0
        %745 = vmatprep.subr.bf16.mxu0 0
        %746 = vmatpush1.bf16.msra.mxu0 0
        %747 = vmatprep.subr.bf16.mxu0 0
        %748 = vmatpush1.bf16.msra.mxu0 0
        %749 = vmatprep.subr.bf16.mxu0 0
        %750 = vmatpush1.bf16.msra.mxu0 0
        %751 = vmatprep.subr.bf16.mxu0 0
        %752 = vmatpush1.bf16.msra.mxu0 %v735
        %753 = vmatprep.subr.bf16.mxu0 0
        %754 = vmatpush2.bf16.msra.mxu0 0
        %755 = vmatprep.subr.bf16.mxu0 0
        %756 = vmatpush2.bf16.msra.mxu0 0
        %757 = vmatprep.subr.bf16.mxu0 0
        %758 = vmatpush2.bf16.msra.mxu0 0
        %759 = vmatprep.subr.bf16.mxu0 0
        %760 = vmatpush2.bf16.msra.mxu0 0
        %761 = vmatprep.subr.bf16.mxu0 0
        %762 = vmatpush2.bf16.msra.mxu0 0
        %763 = vmatprep.subr.bf16.mxu0 0
        %764 = vmatpush2.bf16.msra.mxu0 0
        %765 = vmatprep.subr.bf16.mxu0 0
        %766 = vmatpush2.bf16.msra.mxu0 0
        %767 = vmatprep.subr.bf16.mxu0 0
        %768 = vmatpush2.bf16.msra.mxu0 0
        %769 = vmatprep.mubr.bf16.mxu0 0
        %770 = vmatmul.mubr.bf16.gmra.mxu0 %v257
        %v771 = vpop.f32.mrf.mxu0
        %v772 = vadd.f32 0.0, %v771
        %v773 = vpop.f32.mrf.mxu0
        %v774 = vpop.f32.mrf.mxu0
        %v775 = vadd.f32 0.0, %v774
        %v776 = vpop.f32.mrf.mxu0
        %777 = vdwg.mxu0
        %v778 = vlaneseq
        %v779 = vshrl.u32 %v778, 7
        %v780 = vsub.s32 4, %v779
        %v781 = vrot.slane %v234, %v780
        %v782 = vmul.f32 %v781, %v772
        %v783 = vlaneseq
        %v784 = vshrl.u32 %v783, 7
        %v785 = vsub.s32 4, %v784
        %v786 = vrot.slane %v235, %v785
        %v787 = vmul.f32 %v786, %v772
        %v789 = vrot.slane %v787, 3
        %v791 = vadd.f32 %v782, %v789
        %v792 = vlaneseq
        %v793 = vshrl.u32 %v792, 7
        %v794 = vsub.s32 4, %v793
        %v795 = vrot.slane %v236, %v794
        %v796 = vmul.f32 %v795, %v772
        %v797 = vmul.f32 %v795, %v775
        %v800 = vrot.slane %v796, 6
        %v801 = vrot.slane %v797, 6
        %v802 = vsel %vm326, %v800, %v801
        %v804 = vadd.f32 %v791, %v802
        %v805 = vlaneseq
        %v806 = vshrl.u32 %v805, 7
        %v807 = vsub.s32 4, %v806
        %v808 = vrot.slane %v333, %v807
        %vm809 = vcmp.eq.s32.totalorder %v808, 1
        %v810 = vsel %vm809, %v342, %v804
        %v813 = vunpack.c.l.s4 1966171168
        %v814 = vunpack.c.0.s8 %v813
        %v815 = vlaneseq
        %v816 = vshrl.u32 %v815, 7
        %v817 = vsub.s32 %v814, %v816
        %v818 = vrot.slane %v810, %v817
        %v819 = vcombine.high %v818, %v818
        %v821 = vunpack.c.l.s4 1966171168
        %v822 = vunpack.c.0.s8 %v821
        %v823 = vlaneseq
        %v824 = vshrl.u32 %v823, 7
        %v825 = vsub.s32 %v822, %v824
        %v826 = vrot.slane %v818, %v825
        %v828 = vunpack.c.l.s4 1966171168
        %v829 = vunpack.c.0.s8 %v828
        %v830 = vlaneseq
        %v831 = vshrl.u32 %v830, 7
        %v832 = vsub.s32 %v829, %v831
        %v833 = vrot.slane %v819, %v832
        %v834 = vcombine.high %v826, %v826
        %838 = vst [vmem:[%s227 + $0x4] sm:$0x1] %v826
        %839 = vst [vmem:[%s227 + $0xc] sm:$0x1] %v833
        %840 = vst [vmem:[%s227 + $0x14] sm:$0x1] %v834
        %841 = vst [vmem:[%s376] sm:$0x10] %v375
        %v842 = vlaneseq
        %v843 = vshrl.u32 %v842, 7
        %v844 = vsub.s32 5, %v843
        %v845 = vrot.slane %v233, %v844
        %vm846 = vcmp.eq.s32.totalorder %v241, %v845
        %v847 = vsel %vm846, 1, 0
        %v848 = vcvt.s32.f32 %v847
        %v849 = vpack.c.bf16 %v848, %v848
        %v851 = vsel %vm259, %v849, 0
        %853 = vmatprep.subr.bf16.mxu0 0
        %854 = vmatpush1.bf16.msra.mxu0 0
        %855 = vmatprep.subr.bf16.mxu0 0
        %856 = vmatpush1.bf16.msra.mxu0 0
        %857 = vmatprep.subr.bf16.mxu0 0
        %858 = vmatpush1.bf16.msra.mxu0 0
        %859 = vmatprep.subr.bf16.mxu0 0
        %860 = vmatpush1.bf16.msra.mxu0 0
        %861 = vmatprep.subr.bf16.mxu0 0
        %862 = vmatpush1.bf16.msra.mxu0 0
        %863 = vmatprep.subr.bf16.mxu0 0
        %864 = vmatpush1.bf16.msra.mxu0 0
        %865 = vmatprep.subr.bf16.mxu0 0
        %866 = vmatpush1.bf16.msra.mxu0 0
        %867 = vmatprep.subr.bf16.mxu0 0
        %868 = vmatpush1.bf16.msra.mxu0 %v851
        %869 = vmatprep.subr.bf16.mxu0 0
        %870 = vmatpush2.bf16.msra.mxu0 0
        %871 = vmatprep.subr.bf16.mxu0 0
        %872 = vmatpush2.bf16.msra.mxu0 0
        %873 = vmatprep.subr.bf16.mxu0 0
        %874 = vmatpush2.bf16.msra.mxu0 0
        %875 = vmatprep.subr.bf16.mxu0 0
        %876 = vmatpush2.bf16.msra.mxu0 0
        %877 = vmatprep.subr.bf16.mxu0 0
        %878 = vmatpush2.bf16.msra.mxu0 0
        %879 = vmatprep.subr.bf16.mxu0 0
        %880 = vmatpush2.bf16.msra.mxu0 0
        %881 = vmatprep.subr.bf16.mxu0 0
        %882 = vmatpush2.bf16.msra.mxu0 0
        %883 = vmatprep.subr.bf16.mxu0 0
        %884 = vmatpush2.bf16.msra.mxu0 0
        %885 = vmatprep.mubr.bf16.mxu0 0
        %886 = vmatmul.mubr.bf16.gmra.mxu0 %v257
        %v887 = vpop.f32.mrf.mxu0
        %v888 = vadd.f32 0.0, %v887
        %v889 = vpop.f32.mrf.mxu0
        %v890 = vpop.f32.mrf.mxu0
        %v891 = vadd.f32 0.0, %v890
        %v892 = vpop.f32.mrf.mxu0
        %893 = vdwg.mxu0
        %v894 = vlaneseq
        %v895 = vshrl.u32 %v894, 7
        %v896 = vsub.s32 5, %v895
        %v897 = vrot.slane %v234, %v896
        %v898 = vmul.f32 %v897, %v888
        %v899 = vlaneseq
        %v900 = vshrl.u32 %v899, 7
        %v901 = vsub.s32 5, %v900
        %v902 = vrot.slane %v235, %v901
        %v903 = vmul.f32 %v902, %v888
        %v905 = vrot.slane %v903, 3
        %v907 = vadd.f32 %v898, %v905
        %v908 = vlaneseq
        %v909 = vshrl.u32 %v908, 7
        %v910 = vsub.s32 5, %v909
        %v911 = vrot.slane %v236, %v910
        %v912 = vmul.f32 %v911, %v888
        %v913 = vmul.f32 %v911, %v891
        %v916 = vrot.slane %v912, 6
        %v917 = vrot.slane %v913, 6
        %v918 = vsel %vm326, %v916, %v917
        %v920 = vadd.f32 %v907, %v918
        %v921 = vlaneseq
        %v922 = vshrl.u32 %v921, 7
        %v923 = vsub.s32 5, %v922
        %v924 = vrot.slane %v333, %v923
        %vm925 = vcmp.eq.s32.totalorder %v924, 1
        %v926 = vsel %vm925, %v342, %v920
        %v929 = vunpack.c.l.s4 1966171168
        %v930 = vunpack.c.0.s8 %v929
        %v931 = vlaneseq
        %v932 = vshrl.u32 %v931, 7
        %v933 = vsub.s32 %v930, %v932
        %v934 = vrot.slane %v926, %v933
        %v935 = vcombine.high %v934, %v934
        %v937 = vunpack.c.l.s4 1966171168
        %v938 = vunpack.c.0.s8 %v937
        %v939 = vlaneseq
        %v940 = vshrl.u32 %v939, 7
        %v941 = vsub.s32 %v938, %v940
        %v942 = vrot.slane %v934, %v941
        %v944 = vunpack.c.l.s4 1966171168
        %v945 = vunpack.c.0.s8 %v944
        %v946 = vlaneseq
        %v947 = vshrl.u32 %v946, 7
        %v948 = vsub.s32 %v945, %v947
        %v949 = vrot.slane %v935, %v948
        %v950 = vcombine.high %v942, %v942
        %954 = vst [vmem:[%s227 + $0x5] sm:$0x1] %v942
        %955 = vst [vmem:[%s227 + $0xd] sm:$0x1] %v949
        %956 = vst [vmem:[%s227 + $0x15] sm:$0x1] %v950
        %957 = vst [vmem:[%s376] sm:$0x20] %v375
        %v958 = vlaneseq
        %v959 = vshrl.u32 %v958, 7
        %v960 = vsub.s32 6, %v959
        %v961 = vrot.slane %v233, %v960
        %vm962 = vcmp.eq.s32.totalorder %v241, %v961
        %v963 = vsel %vm962, 1, 0
        %v964 = vcvt.s32.f32 %v963
        %v965 = vpack.c.bf16 %v964, %v964
        %v967 = vsel %vm259, %v965, 0
        %969 = vmatprep.subr.bf16.mxu0 0
        %970 = vmatpush1.bf16.msra.mxu0 0
        %971 = vmatprep.subr.bf16.mxu0 0
        %972 = vmatpush1.bf16.msra.mxu0 0
        %973 = vmatprep.subr.bf16.mxu0 0
        %974 = vmatpush1.bf16.msra.mxu0 0
        %975 = vmatprep.subr.bf16.mxu0 0
        %976 = vmatpush1.bf16.msra.mxu0 0
        %977 = vmatprep.subr.bf16.mxu0 0
        %978 = vmatpush1.bf16.msra.mxu0 0
        %979 = vmatprep.subr.bf16.mxu0 0
        %980 = vmatpush1.bf16.msra.mxu0 0
        %981 = vmatprep.subr.bf16.mxu0 0
        %982 = vmatpush1.bf16.msra.mxu0 0
        %983 = vmatprep.subr.bf16.mxu0 0
        %984 = vmatpush1.bf16.msra.mxu0 %v967
        %985 = vmatprep.subr.bf16.mxu0 0
        %986 = vmatpush2.bf16.msra.mxu0 0
        %987 = vmatprep.subr.bf16.mxu0 0
        %988 = vmatpush2.bf16.msra.mxu0 0
        %989 = vmatprep.subr.bf16.mxu0 0
        %990 = vmatpush2.bf16.msra.mxu0 0
        %991 = vmatprep.subr.bf16.mxu0 0
        %992 = vmatpush2.bf16.msra.mxu0 0
        %993 = vmatprep.subr.bf16.mxu0 0
        %994 = vmatpush2.bf16.msra.mxu0 0
        %995 = vmatprep.subr.bf16.mxu0 0
        %996 = vmatpush2.bf16.msra.mxu0 0
        %997 = vmatprep.subr.bf16.mxu0 0
        %998 = vmatpush2.bf16.msra.mxu0 0
        %999 = vmatprep.subr.bf16.mxu0 0
        %1000 = vmatpush2.bf16.msra.mxu0 0
        %1001 = vmatprep.mubr.bf16.mxu0 0
        %1002 = vmatmul.mubr.bf16.gmra.mxu0 %v257
        %v1003 = vpop.f32.mrf.mxu0
        %v1004 = vadd.f32 0.0, %v1003
        %v1005 = vpop.f32.mrf.mxu0
        %v1006 = vpop.f32.mrf.mxu0
        %v1007 = vadd.f32 0.0, %v1006
        %v1008 = vpop.f32.mrf.mxu0
        %1009 = vdwg.mxu0
        %v1010 = vlaneseq
        %v1011 = vshrl.u32 %v1010, 7
        %v1012 = vsub.s32 6, %v1011
        %v1013 = vrot.slane %v234, %v1012
        %v1014 = vmul.f32 %v1013, %v1004
        %v1015 = vlaneseq
        %v1016 = vshrl.u32 %v1015, 7
        %v1017 = vsub.s32 6, %v1016
        %v1018 = vrot.slane %v235, %v1017
        %v1019 = vmul.f32 %v1018, %v1004
        %v1021 = vrot.slane %v1019, 3
        %v1023 = vadd.f32 %v1014, %v1021
        %v1024 = vlaneseq
        %v1025 = vshrl.u32 %v1024, 7
        %v1026 = vsub.s32 6, %v1025
        %v1027 = vrot.slane %v236, %v1026
        %v1028 = vmul.f32 %v1027, %v1004
        %v1029 = vmul.f32 %v1027, %v1007
        %v1032 = vrot.slane %v1028, 6
        %v1033 = vrot.slane %v1029, 6
        %v1034 = vsel %vm326, %v1032, %v1033
        %v1036 = vadd.f32 %v1023, %v1034
        %v1037 = vlaneseq
        %v1038 = vshrl.u32 %v1037, 7
        %v1039 = vsub.s32 6, %v1038
        %v1040 = vrot.slane %v333, %v1039
        %vm1041 = vcmp.eq.s32.totalorder %v1040, 1
        %v1042 = vsel %vm1041, %v342, %v1036
        %v1045 = vunpack.c.l.s4 1966171168
        %v1046 = vunpack.c.0.s8 %v1045
        %v1047 = vlaneseq
        %v1048 = vshrl.u32 %v1047, 7
        %v1049 = vsub.s32 %v1046, %v1048
        %v1050 = vrot.slane %v1042, %v1049
        %v1051 = vcombine.high %v1050, %v1050
        %v1053 = vunpack.c.l.s4 1966171168
        %v1054 = vunpack.c.0.s8 %v1053
        %v1055 = vlaneseq
        %v1056 = vshrl.u32 %v1055, 7
        %v1057 = vsub.s32 %v1054, %v1056
        %v1058 = vrot.slane %v1050, %v1057
        %v1060 = vunpack.c.l.s4 1966171168
        %v1061 = vunpack.c.0.s8 %v1060
        %v1062 = vlaneseq
        %v1063 = vshrl.u32 %v1062, 7
        %v1064 = vsub.s32 %v1061, %v1063
        %v1065 = vrot.slane %v1051, %v1064
        %v1066 = vcombine.high %v1058, %v1058
        %1070 = vst [vmem:[%s227 + $0x6] sm:$0x1] %v1058
        %1071 = vst [vmem:[%s227 + $0xe] sm:$0x1] %v1065
        %1072 = vst [vmem:[%s227 + $0x16] sm:$0x1] %v1066
        %1073 = vst [vmem:[%s376] sm:$0x40] %v375
        %v1074 = vlaneseq
        %v1075 = vshrl.u32 %v1074, 7
        %v1076 = vsub.s32 7, %v1075
        %v1077 = vrot.slane %v233, %v1076
        %vm1078 = vcmp.eq.s32.totalorder %v241, %v1077
        %v1079 = vsel %vm1078, 1, 0
        %v1080 = vcvt.s32.f32 %v1079
        %v1081 = vpack.c.bf16 %v1080, %v1080
        %v1083 = vsel %vm259, %v1081, 0
        %1085 = vmatprep.subr.bf16.mxu0 0
        %1086 = vmatpush1.bf16.msra.mxu0 0
        %1087 = vmatprep.subr.bf16.mxu0 0
        %1088 = vmatpush1.bf16.msra.mxu0 0
        %1089 = vmatprep.subr.bf16.mxu0 0
        %1090 = vmatpush1.bf16.msra.mxu0 0
        %1091 = vmatprep.subr.bf16.mxu0 0
        %1092 = vmatpush1.bf16.msra.mxu0 0
        %1093 = vmatprep.subr.bf16.mxu0 0
        %1094 = vmatpush1.bf16.msra.mxu0 0
        %1095 = vmatprep.subr.bf16.mxu0 0
        %1096 = vmatpush1.bf16.msra.mxu0 0
        %1097 = vmatprep.subr.bf16.mxu0 0
        %1098 = vmatpush1.bf16.msra.mxu0 0
        %1099 = vmatprep.subr.bf16.mxu0 0
        %1100 = vmatpush1.bf16.msra.mxu0 %v1083
        %1101 = vmatprep.subr.bf16.mxu0 0
        %1102 = vmatpush2.bf16.msra.mxu0 0
        %1103 = vmatprep.subr.bf16.mxu0 0
        %1104 = vmatpush2.bf16.msra.mxu0 0
        %1105 = vmatprep.subr.bf16.mxu0 0
        %1106 = vmatpush2.bf16.msra.mxu0 0
        %1107 = vmatprep.subr.bf16.mxu0 0
        %1108 = vmatpush2.bf16.msra.mxu0 0
        %1109 = vmatprep.subr.bf16.mxu0 0
        %1110 = vmatpush2.bf16.msra.mxu0 0
        %1111 = vmatprep.subr.bf16.mxu0 0
        %1112 = vmatpush2.bf16.msra.mxu0 0
        %1113 = vmatprep.subr.bf16.mxu0 0
        %1114 = vmatpush2.bf16.msra.mxu0 0
        %1115 = vmatprep.subr.bf16.mxu0 0
        %1116 = vmatpush2.bf16.msra.mxu0 0
        %1117 = vmatprep.mubr.bf16.mxu0 0
        %1118 = vmatmul.mubr.bf16.gmra.mxu0 %v257
        %v1119 = vpop.f32.mrf.mxu0
        %v1120 = vadd.f32 0.0, %v1119
        %v1121 = vpop.f32.mrf.mxu0
        %v1122 = vpop.f32.mrf.mxu0
        %v1123 = vadd.f32 0.0, %v1122
        %v1124 = vpop.f32.mrf.mxu0
        %1125 = vdwg.mxu0
        %v1126 = vlaneseq
        %v1127 = vshrl.u32 %v1126, 7
        %v1128 = vsub.s32 7, %v1127
        %v1129 = vrot.slane %v234, %v1128
        %v1130 = vmul.f32 %v1129, %v1120
        %v1131 = vlaneseq
        %v1132 = vshrl.u32 %v1131, 7
        %v1133 = vsub.s32 7, %v1132
        %v1134 = vrot.slane %v235, %v1133
        %v1135 = vmul.f32 %v1134, %v1120
        %v1137 = vrot.slane %v1135, 3
        %v1139 = vadd.f32 %v1130, %v1137
        %v1140 = vlaneseq
        %v1141 = vshrl.u32 %v1140, 7
        %v1142 = vsub.s32 7, %v1141
        %v1143 = vrot.slane %v236, %v1142
        %v1144 = vmul.f32 %v1143, %v1120
        %v1145 = vmul.f32 %v1143, %v1123
        %v1148 = vrot.slane %v1144, 6
        %v1149 = vrot.slane %v1145, 6
        %v1150 = vsel %vm326, %v1148, %v1149
        %v1152 = vadd.f32 %v1139, %v1150
        %v1153 = vlaneseq
        %v1154 = vshrl.u32 %v1153, 7
        %v1155 = vsub.s32 7, %v1154
        %v1156 = vrot.slane %v333, %v1155
        %vm1157 = vcmp.eq.s32.totalorder %v1156, 1
        %v1158 = vsel %vm1157, %v342, %v1152
        %v1161 = vunpack.c.l.s4 1966171168
        %v1162 = vunpack.c.0.s8 %v1161
        %v1163 = vlaneseq
        %v1164 = vshrl.u32 %v1163, 7
        %v1165 = vsub.s32 %v1162, %v1164
        %v1166 = vrot.slane %v1158, %v1165
        %v1167 = vcombine.high %v1166, %v1166
        %v1169 = vunpack.c.l.s4 1966171168
        %v1170 = vunpack.c.0.s8 %v1169
        %v1171 = vlaneseq
        %v1172 = vshrl.u32 %v1171, 7
        %v1173 = vsub.s32 %v1170, %v1172
        %v1174 = vrot.slane %v1166, %v1173
        %v1176 = vunpack.c.l.s4 1966171168
        %v1177 = vunpack.c.0.s8 %v1176
        %v1178 = vlaneseq
        %v1179 = vshrl.u32 %v1178, 7
        %v1180 = vsub.s32 %v1177, %v1179
        %v1181 = vrot.slane %v1167, %v1180
        %v1182 = vcombine.high %v1174, %v1174
        %1186 = vst [vmem:[%s227 + $0x7] sm:$0x1] %v1174
        %1187 = vst [vmem:[%s227 + $0xf] sm:$0x1] %v1181
        %1188 = vst [vmem:[%s227 + $0x17] sm:$0x1] %v1182
        %1189 = vst [vmem:[%s376] sm:$0x80] %v375
        %s1190 = sand.u32 %s123, 1
        %s1191 = scalar_lea.sflag [#allocation4], %s1190
        %s1192 = sand.u32 %s123, 1
        %s1193 = smul.addr %s1192, 32
        %s1194 = scalar_lea.vmem [#allocation5], %s1193
        // Predicated region
        $region41: #{tpu_custom_call.1} parent=35 // pred_check
          %p1195 = pneg %p133
        $region42: #{tpu_custom_call.1} parent=35 // pred_check_branch
          %1197 = sbr.rel (%p1195) target = $region44
        $region43: #{tpu_custom_call.1} parent=35 // pred_region
          %s1199 = ssub.s32 512, 512
          %1200 = vsyncadd %s1191, %s1199
          %s1201 = smul.addr %s21, 128
          %s1202 = scalar_lea.hbm %s4, %s1201
          %s1203 = sshll.u32 %s1194, 4
          %s1204 = int_to_ptr.vmem [resolvable:$true] %s1203
          %1209 = dma.vmem_to_hbm [thread:$0]  %s1204, 512, %s1202, %s1191, 128, 256, 8
        $region44: #{tpu_custom_call.1} parent=35 // pred_fallthru
          _
      $region36: #{tpu_custom_call.1} parent=5 // pred_fallthru
        _
      %p1210 = scmp.le.s32.totalorder 2, %s16
      // Predicated region
      $region45: #{tpu_custom_call.1} parent=5 // pred_check
        %p1211 = pneg %p1210
      $region46: #{tpu_custom_call.1} parent=5 // pred_check_branch
        %1213 = sbr.rel (%p1211) target = $region48
      $region47: #{tpu_custom_call.1} parent=5 // pred_region
        %s1214 = ssub.s32 %s16, 2
        // Predicated region
        $region49: #{tpu_custom_call.1} parent=47 // pred_check
          %p1215 = pneg %p139
        $region50: #{tpu_custom_call.1} parent=47 // pred_check_branch
          %1217 = sbr.rel (%p1215) target = $region52
        $region51: #{tpu_custom_call.1} parent=47 // pred_region
          %s1218 = sand.u32 %s124, 1
          %s1219 = scalar_lea.sflag [#allocation4], %s1218
          %s1220 = sand.u32 %s124, 1
          %s1221 = smul.addr %s1220, 32
          %s1222 = scalar_lea.vmem [#allocation5], %s1221
          %1223 = dma.done %s1219, 512
        $region52: #{tpu_custom_call.1} parent=47 // pred_fallthru
          _
      $region48: #{tpu_custom_call.1} parent=5 // pred_fallthru
        _
    $region6: #{tpu_custom_call.1} parent=1 // loop_footer
      %s20 = sadd.s32 1, %s16
    $region7: #{tpu_custom_call.1} parent=1 // loop_footer_branch
      %15 = sbr.rel target = $region3
    $region8: #{tpu_custom_call.1} parent=1 // loop_exit
      _
    %1224 = vsyncpa [#allocation3], 1
    %s1225 = scalar_lea.sflag [#allocation3], 1
    %1226 = vsyncpa %s1225, 1
    %1227 = vsyncpa [#allocation4], 1
    %s1228 = scalar_lea.sflag [#allocation4], 1
    %1229 = vsyncpa %s1228, 1

</llo_original>
